<compile_context>
chip_gen: v7x
topology: tpu7x:2x2x1
jax: 0.10.0
libtpu: 0.0.40
codegen_flags: <defaults>
</compile_context>

<pallas_src>
import math

import jax
import jax.numpy as jnp
from jax.experimental import pallas as pl
from jax.experimental.pallas import tpu as pltpu


# ----------------------------------------------------------------------------
# Fused kernel: wavefronted num_layers-deep LSTM + collapsed affine head.
# ----------------------------------------------------------------------------
def make_fused_kernel(L, T, B, H):
    H4 = 4 * H

    def kernel(x_ref, tsat_ref, mf_ref, wih1_ref, b1_ref, wcomb_ref, brest_ref,
               wh_ref, wt_ref, wm_ref, bc_ref, out_ref, xg_ref):
        # Gate-activation constants: with pre-scaled weights (0.5 on i/f/o
        # lanes, 1.0 on g), act = tanh(g)*a + b yields sigmoid on i/f/o and
        # tanh on g with a SINGLE transcendental pass per gate vreg.
        lane = jax.lax.broadcasted_iota(jnp.int32, (1, H4), 1)
        is_g = (lane >= 2 * H) & (lane < 3 * H)
        a_vec = jnp.where(is_g, 1.0, 0.5)
        b_vec = jnp.where(is_g, 0.0, 0.5)

        # Hoisted layer-0 input projection for all T steps (off the serial
        # recurrence path).  Bias + gate pre-scale are folded into wih1/b1.
        # Lane-dense (T*B, 4H) scratch -> unmasked 128-lane stores.
        xg_ref[...] = (
            jnp.dot(x_ref[...], wih1_ref[...],
                    preferred_element_type=jnp.float32)
            + b1_ref[...])

        # Per-layer row blocks of the combined wavefront weight, loaded once
        # and held across the loop:
        #   w_blk[l] = [W_hh_l | W_ih_{l+1}]  (H, 8H)   (last layer: (H, 4H))
        w_blk = [wcomb_ref[l * H:(l + 1) * H, l * H4:min(l + 2, L) * H4]
                 for l in range(L)]

        def wave_step(s, hs, cs, *, static):
            # One wavefront step: layer l advances to time t = s - l.  The
            # per-layer MXU pushes within a step are mutually independent.
            contrib = [
                jnp.dot(hs[l].astype(w_blk[l].dtype), w_blk[l],
                        preferred_element_type=jnp.float32)
                for l in range(L)
            ]
            new_hs, new_cs = list(hs), list(cs)
            for l in range(L):
                if static and not 0 <= s - l < T:
                    continue                         # layer idle on the ramp
                g = contrib[l][:, 0:H4]              # h_l @ W_hh_l (pre-scaled)
                if l == 0:
                    if static:
                        g = g + xg_ref[s * B:(s + 1) * B, :]
                    else:
                        row = pl.multiple_of(s * B, B)
                        g = g + xg_ref[pl.ds(row, B), :]
                else:
                    # h_{l-1} @ W_ih_l came out of layer (l-1)'s push.
                    g = g + contrib[l - 1][:, H4:2 * H4] + brest_ref[l - 1:l, :]
                act = jnp.tanh(g) * a_vec + b_vec    # single EUP pass + FMA
                i = act[:, 0:H]
                f = act[:, H:2 * H]
                gg = act[:, 2 * H:3 * H]
                o = act[:, 3 * H:4 * H]
                c_new = f * cs[l] + i * gg
                new_cs[l] = c_new
                new_hs[l] = o * jnp.tanh(c_new)
            return tuple(new_hs), tuple(new_cs)

        zeros = jnp.zeros((B, H), jnp.float32)
        hs = tuple(zeros for _ in range(L))
        cs = tuple(zeros for _ in range(L))

        if T >= L:
            for s in range(L - 1):                               # ramp-up
                hs, cs = wave_step(s, hs, cs, static=True)

            def body(s, carry):
                return wave_step(s, carry[0], carry[1], static=False)

            hs, cs = jax.lax.fori_loop(L - 1, T, body, (hs, cs), unroll=True)

            for s in range(T, T + L - 1):                        # ramp-down
                hs, cs = wave_step(s, hs, cs, static=True)
        else:  # degenerate T < L: fully static wavefront
            for s in range(T + L - 1):
                hs, cs = wave_step(s, hs, cs, static=True)

        h_last = hs[L - 1]                                       # h_{L-1, T-1}

        # Collapsed affine head: fc -> stack(y, Tsat, mf) -> num_flat dense
        # layers, pre-combined into (Wh, wt, wm, bc) by prepare_params().
        out_ref[...] = (
            jnp.dot(h_last, wh_ref[...], preferred_element_type=jnp.float32)
            + tsat_ref[...] * wt_ref[...]
            + mf_ref[...] * wm_ref[...]
            + bc_ref[...])

    return kernel


def lstm_regression_forward(prepared, x, tsat, mf):
    # x: (B, T, input_size), batch_first like nn.LSTM(..., batch_first=True)
    B, T, D = x.shape
    H = prepared["brest"].shape[1] // 4
    L = prepared["wcomb"].shape[0] // H
    wh, wt, wm, bc = prepared["head"]
    out_dim = wh.shape[1]

    # Time-major flat layout: row t*B + b == x[b, t, :].
    x_flat = jnp.transpose(x, (1, 0, 2)).reshape(T * B, D).astype(jnp.float32)
    tsat2 = tsat.reshape(B, 1).astype(jnp.float32)
    mf2 = mf.reshape(B, 1).astype(jnp.float32)

    inputs = [x_flat, tsat2, mf2, prepared["wih1"], prepared["b1"],
              prepared["wcomb"], prepared["brest"], wh, wt, wm, bc]

    vmem = pl.BlockSpec(memory_space=pltpu.MemorySpace.VMEM)
    return pl.pallas_call(
        make_fused_kernel(L, T, B, H),
        out_shape=jax.ShapeDtypeStruct((B, out_dim), jnp.float32),
        in_specs=[vmem] * len(inputs),
        out_specs=vmem,
        scratch_shapes=[
            pltpu.VMEM((T * B, 4 * H), jnp.float32),  # hoisted layer-0 proj
        ],
    )(*inputs)


# ----------------------------------------------------------------------------
# One-time parameter preparation (wavefront weight, gate pre-scale, bf16 cast,
# head collapse).
# ----------------------------------------------------------------------------
def prepare_params(params, compute_dtype=jnp.bfloat16):
    lstm = params["lstm"]
    L = len(lstm)
    H = lstm[0]["w_hh"].shape[1]
    H4 = 4 * H

    # Per-lane gate pre-scale (PyTorch gate order [i, f, g, o]): 0.5 on i/f/o,
    # 1.0 on g, so the kernel computes sigmoid(x) = 0.5*tanh(x/2) + 0.5 with a
    # single tanh pass.  Scaling by 0.5 is exact in floating point.
    lane = jnp.arange(H4)
    gate_scale = jnp.where((lane >= 2 * H) & (lane < 3 * H), 1.0, 0.5
                           ).astype(jnp.float32)

    # Layer-0 input projection (hoisted in-kernel): f32, bias folded, pre-scaled.
    wih1 = jnp.asarray(lstm[0]["w_ih"], jnp.float32).T * gate_scale      # (D, 4H)
    b1 = ((lstm[0]["b_ih"] + lstm[0]["b_hh"]).astype(jnp.float32)
          * gate_scale).reshape(1, H4)

    # Combined wavefront weight (L*H, L*4H):
    #   column block l (layer-l gates) <- rows of h_l  : W_hh_l
    #                                  <- rows of h_l-1: W_ih_l   (l >= 1)
    wcomb = jnp.zeros((L * H, L * H4), jnp.float32)
    for l in range(L):
        whh = jnp.asarray(lstm[l]["w_hh"], jnp.float32).T * gate_scale   # (H, 4H)
        wcomb = wcomb.at[l * H:(l + 1) * H, l * H4:(l + 1) * H4].set(whh)
        if l >= 1:
            wih = jnp.asarray(lstm[l]["w_ih"], jnp.float32).T * gate_scale
            wcomb = wcomb.at[(l - 1) * H:l * H, l * H4:(l + 1) * H4].set(wih)
    wcomb = wcomb.astype(compute_dtype)   # bf16 MXU operands on the hot path

    if L > 1:
        brest = jnp.stack(
            [(lstm[l]["b_ih"] + lstm[l]["b_hh"]).astype(jnp.float32) * gate_scale
             for l in range(1, L)], axis=0)                              # (L-1, 4H)
    else:
        brest = jnp.zeros((1, H4), jnp.float32)

    # Collapse the (activation-free) head: fc -> stack(y, Tsat, mf) -> dense.
    fc_w, fc_b = params["fc"]        # (num_classes, H), (num_classes,)
    assert fc_w.shape[0] == 1, "stack/squeeze in forward() requires num_classes == 1"
    A = jnp.eye(3, dtype=jnp.float32)
    c = jnp.zeros((1, 3), jnp.float32)
    for (w, b) in params["head"]:
        A = A @ w.T
        c = c @ w.T + b.reshape(1, -1)
    # out = [fc(h), Tsat, mf] @ A + c
    wh = fc_w.T.astype(jnp.float32) @ A[0:1, :]                # (H, out)
    wt = A[1:2, :]                                             # (1, out)
    wm = A[2:3, :]                                             # (1, out)
    bc = fc_b.reshape(1, -1).astype(jnp.float32) @ A[0:1, :] + c

    return dict(wih1=wih1, b1=b1, wcomb=wcomb, brest=brest,
                head=(wh, wt, wm, bc))


# ----------------------------------------------------------------------------
# Parameter init (deterministic, PyTorch-style uniform(-1/sqrt(fan), 1/sqrt(fan)))
# ----------------------------------------------------------------------------
def init_params(key, input_size, hidden_size, num_layers, num_classes, num_flat):
    keys = iter(jax.random.split(key, 128))

    def unif(shape, fan):
        s = 1.0 / math.sqrt(fan)
        return jax.random.uniform(next(keys), shape, jnp.float32, -s, s)

    H = hidden_size
    lstm = []
    for layer in range(num_layers):
        d_in = input_size if layer == 0 else H
        lstm.append(dict(
            w_ih=unif((4 * H, d_in), H),
            w_hh=unif((4 * H, H), H),
            b_ih=unif((4 * H,), H),
            b_hh=unif((4 * H,), H),
        ))

    fc_w = unif((num_classes, H), H)
    fc_b = unif((num_classes,), H)

    h2, h4 = round(H / 2), round(H / 4)
    head_dims = {
        1: [(1, 3)],
        2: [(H, 3), (1, H)],
        3: [(H, 3), (h2, H), (1, h2)],
        4: [(H, 3), (h2, H), (h4, h2), (1, h4)],
    }[num_flat]
    head = [(unif((o, i), i), unif((o,), i)) for (o, i) in head_dims]

    return dict(lstm=lstm, fc=(fc_w, fc_b), head=head)


# ----------------------------------------------------------------------------
# Pure-JAX reference on the raw PyTorch-layout params.  recurrent_dtype=bf16
# emulates the kernel's bf16 MXU-operand quantization (weights + hidden state
# on the recurrent / inter-layer path), keeping all math in f32 otherwise.
# ----------------------------------------------------------------------------
def lstm_regression_ref(params, x, tsat, mf, recurrent_dtype=jnp.float32):
    def q(v):
        return v.astype(recurrent_dtype).astype(jnp.float32)

    B, T, _ = x.shape
    h_in = x.astype(jnp.float32)
    for layer, lp in enumerate(params["lstm"]):
        H = lp["w_hh"].shape[1]
        w_ih = jnp.asarray(lp["w_ih"], jnp.float32)
        if layer > 0:
            w_ih = q(w_ih)            # inter-layer proj runs on the MXU path
        w_hh = q(jnp.asarray(lp["w_hh"], jnp.float32))
        b = (lp["b_ih"] + lp["b_hh"]).astype(jnp.float32)
        h = jnp.zeros((B, H), jnp.float32)
        c = jnp.zeros((B, H), jnp.float32)
        outs = []
        for t in range(T):
            x_t = h_in[:, t, :]
            if layer > 0:
                x_t = q(x_t)
            g = x_t @ w_ih.T + q(h) @ w_hh.T + b
            i = jax.nn.sigmoid(g[:, :H])
            f = jax.nn.sigmoid(g[:, H:2 * H])
            gg = jnp.tanh(g[:, 2 * H:3 * H])
            o = jax.nn.sigmoid(g[:, 3 * H:])
            c = f * c + i * gg
            h = o * jnp.tanh(c)
            outs.append(h)
        h_in = jnp.stack(outs, axis=1)
    fc_w, fc_b = params["fc"]
    out = h_in[:, -1, :] @ fc_w.T + fc_b
    out = jnp.stack([out.squeeze(), tsat.squeeze(), mf.squeeze()]).T     # (B, 3)
    for (w, b) in params["head"]:
        out = out @ w.T + b
    return out


if __name__ == "__main__":
    # Small shapes consistent with the module.
    B, T = 8, 8
    input_size, hidden_size = 4, 32
    num_layers, num_classes, num_flat = 2, 1, 3

    key = jax.random.PRNGKey(0)
    kx, kt, km, kp = jax.random.split(key, 4)
    x = jax.random.normal(kx, (B, T, input_size), jnp.float32)
    Tsat = jax.random.normal(kt, (B,), jnp.float32)
    mf = jax.random.normal(km, (B,), jnp.float32)

    params = init_params(kp, input_size, hidden_size, num_layers,
                         num_classes, num_flat)

    fwd = jax.jit(lstm_regression_forward)

    # f32 path: strict check against the PyTorch-equivalent f32 reference.
    prep_f32 = prepare_params(params, compute_dtype=jnp.float32)
    out_f32 = jax.block_until_ready(fwd(prep_f32, x, Tsat, mf))
    ref_f32 = lstm_regression_ref(params, x, Tsat, mf)
    assert out_f32.shape == (B, 1), out_f32.shape
    assert jnp.allclose(out_f32, ref_f32, rtol=5e-4, atol=5e-5), (out_f32, ref_f32)

    # bf16-MXU path (default): check against a reference with the same
    # bf16 quantization applied to the recurrent / inter-layer operands.
    prep_bf16 = prepare_params(params, compute_dtype=jnp.bfloat16)
    out_bf16 = jax.block_until_ready(fwd(prep_bf16, x, Tsat, mf))
    ref_bf16 = lstm_regression_ref(params, x, Tsat, mf,
                                   recurrent_dtype=jnp.bfloat16)
    assert jnp.allclose(out_bf16, ref_bf16, rtol=5e-3, atol=5e-3), (out_bf16, ref_bf16)

    print("KERNEL_OK")
</pallas_src>

<mosaic_0001>
module attributes {stable_mosaic.version = 11 : i64} {
  func.func @kernel(%arg0: memref<64x4xf32, #tpu.memory_space<vmem>>, %arg1: memref<8x1xf32, #tpu.memory_space<vmem>>, %arg2: memref<8x1xf32, #tpu.memory_space<vmem>>, %arg3: memref<4x128xf32, #tpu.memory_space<vmem>>, %arg4: memref<1x128xf32, #tpu.memory_space<vmem>>, %arg5: memref<64x256xf32, #tpu.memory_space<vmem>>, %arg6: memref<1x128xf32, #tpu.memory_space<vmem>>, %arg7: memref<32x1xf32, #tpu.memory_space<vmem>>, %arg8: memref<1x1xf32, #tpu.memory_space<vmem>>, %arg9: memref<1x1xf32, #tpu.memory_space<vmem>>, %arg10: memref<1x1xf32, #tpu.memory_space<vmem>>, %arg11: memref<8x1xf32, #tpu.memory_space<vmem>>, %arg12: memref<64x128xf32, #tpu.memory_space<vmem>>) attributes {dimension_semantics = [], scalar_prefetch = 0 : i64, scratch_operands = 1 : i64, tpu.core_type = #tpu.core_type<tc>} {
    %0 = tpu.iota {dimensions = array<i32: 1>} : vector<1x128xi32>
    %c64_i32 = arith.constant 64 : i32
    %1 = vector.broadcast %c64_i32 : i32 to vector<1x128xi32>
    %2 = arith.cmpi sge, %0, %1 : vector<1x128xi32>
    %c96_i32 = arith.constant 96 : i32
    %3 = vector.broadcast %c96_i32 : i32 to vector<1x128xi32>
    %4 = arith.cmpi slt, %0, %3 : vector<1x128xi32>
    %5 = arith.andi %2, %4 : vector<1x128xi1>
    %cst = arith.constant 1.000000e+00 : f32
    %cst_0 = arith.constant 5.000000e-01 : f32
    %6 = vector.broadcast %cst : f32 to vector<1x128xf32>
    %7 = vector.broadcast %cst_0 : f32 to vector<1x128xf32>
    %8 = arith.select %5, %6, %7 : vector<1x128xi1>, vector<1x128xf32>
    %cst_1 = arith.constant 0.000000e+00 : f32
    %cst_2 = arith.constant 5.000000e-01 : f32
    %9 = vector.broadcast %cst_1 : f32 to vector<1x128xf32>
    %10 = vector.broadcast %cst_2 : f32 to vector<1x128xf32>
    %11 = arith.select %5, %9, %10 : vector<1x128xi1>, vector<1x128xf32>
    %c0 = arith.constant 0 : index
    %c0_3 = arith.constant 0 : index
    %12 = vector.load %arg0[%c0, %c0_3] : memref<64x4xf32, #tpu.memory_space<vmem>>, vector<64x4xf32>
    %c0_4 = arith.constant 0 : index
    %c0_5 = arith.constant 0 : index
    %13 = vector.load %arg3[%c0_4, %c0_5] : memref<4x128xf32, #tpu.memory_space<vmem>>, vector<4x128xf32>
    %cst_6 = arith.constant dense<0.000000e+00> : vector<64x128xf32>
    %14 = tpu.matmul %12, %13, %cst_6 {dimension_numbers = #tpu.dot_dimension_numbers<[1], [0], [0], [1], [0, 0, 1, 1], [], []>} : vector<64x4xf32>, vector<4x128xf32>, vector<64x128xf32> -> vector<64x128xf32>
    %c0_7 = arith.constant 0 : index
    %c0_8 = arith.constant 0 : index
    %15 = vector.load %arg4[%c0_7, %c0_8] : memref<1x128xf32, #tpu.memory_space<vmem>>, vector<1x128xf32>
    %16 = vector.broadcast %15 : vector<1x128xf32> to vector<64x128xf32>
    %17 = arith.addf %14, %16 : vector<64x128xf32>
    %c0_9 = arith.constant 0 : index
    %c0_10 = arith.constant 0 : index
    %18 = vector.load %arg12[%c0_9, %c0_10] : memref<64x128xf32, #tpu.memory_space<vmem>>, vector<64x128xf32>
    tpu.vector_store %arg12[%c0_9, %c0_10], %17 {strides = array<i32>} : memref<64x128xf32, #tpu.memory_space<vmem>>, vector<64x128xf32>,
    %c0_11 = arith.constant 0 : index
    %c0_12 = arith.constant 0 : index
    %19 = vector.load %arg5[%c0_11, %c0_12] : memref<64x256xf32, #tpu.memory_space<vmem>>, vector<32x256xf32>
    %c32 = arith.constant 32 : index
    %c128 = arith.constant 128 : index
    %20 = vector.load %arg5[%c32, %c128] : memref<64x256xf32, #tpu.memory_space<vmem>>, vector<32x128xf32>
    %cst_13 = arith.constant 0.000000e+00 : f32
    %21 = vector.broadcast %cst_13 : f32 to vector<8x32xf32>
    %cst_14 = arith.constant dense<0.000000e+00> : vector<8x256xf32>
    %22 = tpu.matmul %21, %19, %cst_14 {dimension_numbers = #tpu.dot_dimension_numbers<[1], [0], [0], [1], [0, 0, 1, 1], [], []>} : vector<8x32xf32>, vector<32x256xf32>, vector<8x256xf32> -> vector<8x256xf32>
    %23 = vector.extract_strided_slice %22 {offsets = [0, 0], sizes = [8, 128], strides = [1, 1]} : vector<8x256xf32> to vector<8x128xf32>
    %c0_15 = arith.constant 0 : index
    %c0_16 = arith.constant 0 : index
    %24 = vector.load %arg12[%c0_15, %c0_16] : memref<64x128xf32, #tpu.memory_space<vmem>>, vector<8x128xf32>
    %25 = arith.addf %23, %24 : vector<8x128xf32>
    %26 = math.tanh %25 : vector<8x128xf32>
    %27 = vector.broadcast %8 : vector<1x128xf32> to vector<8x128xf32>
    %28 = arith.mulf %26, %27 : vector<8x128xf32>
    %29 = vector.broadcast %11 : vector<1x128xf32> to vector<8x128xf32>
    %30 = arith.addf %28, %29 : vector<8x128xf32>
    %31 = vector.extract_strided_slice %30 {offsets = [0, 0], sizes = [8, 32], strides = [1, 1]} : vector<8x128xf32> to vector<8x32xf32>
    %32 = vector.extract_strided_slice %30 {offsets = [0, 32], sizes = [8, 32], strides = [1, 1]} : vector<8x128xf32> to vector<8x32xf32>
    %33 = vector.extract_strided_slice %30 {offsets = [0, 64], sizes = [8, 32], strides = [1, 1]} : vector<8x128xf32> to vector<8x32xf32>
    %34 = vector.extract_strided_slice %30 {offsets = [0, 96], sizes = [8, 32], strides = [1, 1]} : vector<8x128xf32> to vector<8x32xf32>
    %35 = arith.mulf %32, %21 : vector<8x32xf32>
    %36 = arith.mulf %31, %33 : vector<8x32xf32>
    %37 = arith.addf %35, %36 : vector<8x32xf32>
    %38 = math.tanh %37 : vector<8x32xf32>
    %39 = arith.mulf %34, %38 : vector<8x32xf32>
    %c1_i32 = arith.constant 1 : i32
    %cst_17 = arith.constant dense<0.000000e+00> : vector<8x256xf32>
    %40 = tpu.matmul %39, %19, %cst_17 {dimension_numbers = #tpu.dot_dimension_numbers<[1], [0], [0], [1], [0, 0, 1, 1], [], []>} : vector<8x32xf32>, vector<32x256xf32>, vector<8x256xf32> -> vector<8x256xf32>
    %cst_18 = arith.constant dense<0.000000e+00> : vector<8x128xf32>
    %41 = tpu.matmul %21, %20, %cst_18 {dimension_numbers = #tpu.dot_dimension_numbers<[1], [0], [0], [1], [0, 0, 1, 1], [], []>} : vector<8x32xf32>, vector<32x128xf32>, vector<8x128xf32> -> vector<8x128xf32>
    %42 = vector.extract_strided_slice %40 {offsets = [0, 0], sizes = [8, 128], strides = [1, 1]} : vector<8x256xf32> to vector<8x128xf32>
    %c8_i32 = arith.constant 8 : i32
    %43 = arith.muli %c1_i32, %c8_i32 : i32
    %44 = tpu.assume_multiple %43, 8 : i32
    %45 = arith.index_cast %44 : i32 to index
    %c0_19 = arith.constant 0 : index
    %46 = vector.load %arg12[%45, %c0_19] : memref<64x128xf32, #tpu.memory_space<vmem>>, vector<8x128xf32>
    %47 = arith.addf %42, %46 : vector<8x128xf32>
    %48 = math.tanh %47 : vector<8x128xf32>
    %49 = vector.broadcast %8 : vector<1x128xf32> to vector<8x128xf32>
    %50 = arith.mulf %48, %49 : vector<8x128xf32>
    %51 = vector.broadcast %11 : vector<1x128xf32> to vector<8x128xf32>
    %52 = arith.addf %50, %51 : vector<8x128xf32>
    %53 = vector.extract_strided_slice %52 {offsets = [0, 0], sizes = [8, 32], strides = [1, 1]} : vector<8x128xf32> to vector<8x32xf32>
    %54 = vector.extract_strided_slice %52 {offsets = [0, 32], sizes = [8, 32], strides = [1, 1]} : vector<8x128xf32> to vector<8x32xf32>
    %55 = vector.extract_strided_slice %52 {offsets = [0, 64], sizes = [8, 32], strides = [1, 1]} : vector<8x128xf32> to vector<8x32xf32>
    %56 = vector.extract_strided_slice %52 {offsets = [0, 96], sizes = [8, 32], strides = [1, 1]} : vector<8x128xf32> to vector<8x32xf32>
    %57 = arith.mulf %54, %37 : vector<8x32xf32>
    %58 = arith.mulf %53, %55 : vector<8x32xf32>
    %59 = arith.addf %57, %58 : vector<8x32xf32>
    %60 = math.tanh %59 : vector<8x32xf32>
    %61 = arith.mulf %56, %60 : vector<8x32xf32>
    %62 = vector.extract_strided_slice %40 {offsets = [0, 128], sizes = [8, 128], strides = [1, 1]} : vector<8x256xf32> to vector<8x128xf32>
    %63 = arith.addf %41, %62 : vector<8x128xf32>
    %c0_20 = arith.constant 0 : index
    %c0_21 = arith.constant 0 : index
    %64 = vector.load %arg6[%c0_20, %c0_21] : memref<1x128xf32, #tpu.memory_space<vmem>>, vector<1x128xf32>
    %65 = vector.broadcast %64 : vector<1x128xf32> to vector<8x128xf32>
    %66 = arith.addf %63, %65 : vector<8x128xf32>
    %67 = math.tanh %66 : vector<8x128xf32>
    %68 = vector.broadcast %8 : vector<1x128xf32> to vector<8x128xf32>
    %69 = arith.mulf %67, %68 : vector<8x128xf32>
    %70 = vector.broadcast %11 : vector<1x128xf32> to vector<8x128xf32>
    %71 = arith.addf %69, %70 : vector<8x128xf32>
    %72 = vector.extract_strided_slice %71 {offsets = [0, 0], sizes = [8, 32], strides = [1, 1]} : vector<8x128xf32> to vector<8x32xf32>
    %73 = vector.extract_strided_slice %71 {offsets = [0, 32], sizes = [8, 32], strides = [1, 1]} : vector<8x128xf32> to vector<8x32xf32>
    %74 = vector.extract_strided_slice %71 {offsets = [0, 64], sizes = [8, 32], strides = [1, 1]} : vector<8x128xf32> to vector<8x32xf32>
    %75 = vector.extract_strided_slice %71 {offsets = [0, 96], sizes = [8, 32], strides = [1, 1]} : vector<8x128xf32> to vector<8x32xf32>
    %76 = arith.mulf %73, %21 : vector<8x32xf32>
    %77 = arith.mulf %72, %74 : vector<8x32xf32>
    %78 = arith.addf %76, %77 : vector<8x32xf32>
    %79 = math.tanh %78 : vector<8x32xf32>
    %80 = arith.mulf %75, %79 : vector<8x32xf32>
    %c2_i32 = arith.constant 2 : i32
    %cst_22 = arith.constant dense<0.000000e+00> : vector<8x256xf32>
    %81 = tpu.matmul %61, %19, %cst_22 {dimension_numbers = #tpu.dot_dimension_numbers<[1], [0], [0], [1], [0, 0, 1, 1], [], []>} : vector<8x32xf32>, vector<32x256xf32>, vector<8x256xf32> -> vector<8x256xf32>
    %cst_23 = arith.constant dense<0.000000e+00> : vector<8x128xf32>
    %82 = tpu.matmul %80, %20, %cst_23 {dimension_numbers = #tpu.dot_dimension_numbers<[1], [0], [0], [1], [0, 0, 1, 1], [], []>} : vector<8x32xf32>, vector<32x128xf32>, vector<8x128xf32> -> vector<8x128xf32>
    %83 = vector.extract_strided_slice %81 {offsets = [0, 0], sizes = [8, 128], strides = [1, 1]} : vector<8x256xf32> to vector<8x128xf32>
    %c8_i32_24 = arith.constant 8 : i32
    %84 = arith.muli %c2_i32, %c8_i32_24 : i32
    %85 = tpu.assume_multiple %84, 8 : i32
    %86 = arith.index_cast %85 : i32 to index
    %c0_25 = arith.constant 0 : index
    %87 = vector.load %arg12[%86, %c0_25] : memref<64x128xf32, #tpu.memory_space<vmem>>, vector<8x128xf32>
    %88 = arith.addf %83, %87 : vector<8x128xf32>
    %89 = math.tanh %88 : vector<8x128xf32>
    %90 = vector.broadcast %8 : vector<1x128xf32> to vector<8x128xf32>
    %91 = arith.mulf %89, %90 : vector<8x128xf32>
    %92 = vector.broadcast %11 : vector<1x128xf32> to vector<8x128xf32>
    %93 = arith.addf %91, %92 : vector<8x128xf32>
    %94 = vector.extract_strided_slice %93 {offsets = [0, 0], sizes = [8, 32], strides = [1, 1]} : vector<8x128xf32> to vector<8x32xf32>
    %95 = vector.extract_strided_slice %93 {offsets = [0, 32], sizes = [8, 32], strides = [1, 1]} : vector<8x128xf32> to vector<8x32xf32>
    %96 = vector.extract_strided_slice %93 {offsets = [0, 64], sizes = [8, 32], strides = [1, 1]} : vector<8x128xf32> to vector<8x32xf32>
    %97 = vector.extract_strided_slice %93 {offsets = [0, 96], sizes = [8, 32], strides = [1, 1]} : vector<8x128xf32> to vector<8x32xf32>
    %98 = arith.mulf %95, %59 : vector<8x32xf32>
    %99 = arith.mulf %94, %96 : vector<8x32xf32>
    %100 = arith.addf %98, %99 : vector<8x32xf32>
    %101 = math.tanh %100 : vector<8x32xf32>
    %102 = arith.mulf %97, %101 : vector<8x32xf32>
    %103 = vector.extract_strided_slice %81 {offsets = [0, 128], sizes = [8, 128], strides = [1, 1]} : vector<8x256xf32> to vector<8x128xf32>
    %104 = arith.addf %82, %103 : vector<8x128xf32>
    %c0_26 = arith.constant 0 : index
    %c0_27 = arith.constant 0 : index
    %105 = vector.load %arg6[%c0_26, %c0_27] : memref<1x128xf32, #tpu.memory_space<vmem>>, vector<1x128xf32>
    %106 = vector.broadcast %105 : vector<1x128xf32> to vector<8x128xf32>
    %107 = arith.addf %104, %106 : vector<8x128xf32>
    %108 = math.tanh %107 : vector<8x128xf32>
    %109 = vector.broadcast %8 : vector<1x128xf32> to vector<8x128xf32>
    %110 = arith.mulf %108, %109 : vector<8x128xf32>
    %111 = vector.broadcast %11 : vector<1x128xf32> to vector<8x128xf32>
    %112 = arith.addf %110, %111 : vector<8x128xf32>
    %113 = vector.extract_strided_slice %112 {offsets = [0, 0], sizes = [8, 32], strides = [1, 1]} : vector<8x128xf32> to vector<8x32xf32>
    %114 = vector.extract_strided_slice %112 {offsets = [0, 32], sizes = [8, 32], strides = [1, 1]} : vector<8x128xf32> to vector<8x32xf32>
    %115 = vector.extract_strided_slice %112 {offsets = [0, 64], sizes = [8, 32], strides = [1, 1]} : vector<8x128xf32> to vector<8x32xf32>
    %116 = vector.extract_strided_slice %112 {offsets = [0, 96], sizes = [8, 32], strides = [1, 1]} : vector<8x128xf32> to vector<8x32xf32>
    %117 = arith.mulf %114, %78 : vector<8x32xf32>
    %118 = arith.mulf %113, %115 : vector<8x32xf32>
    %119 = arith.addf %117, %118 : vector<8x32xf32>
    %120 = math.tanh %119 : vector<8x32xf32>
    %121 = arith.mulf %116, %120 : vector<8x32xf32>
    %c3_i32 = arith.constant 3 : i32
    %cst_28 = arith.constant dense<0.000000e+00> : vector<8x256xf32>
    %122 = tpu.matmul %102, %19, %cst_28 {dimension_numbers = #tpu.dot_dimension_numbers<[1], [0], [0], [1], [0, 0, 1, 1], [], []>} : vector<8x32xf32>, vector<32x256xf32>, vector<8x256xf32> -> vector<8x256xf32>
    %cst_29 = arith.constant dense<0.000000e+00> : vector<8x128xf32>
    %123 = tpu.matmul %121, %20, %cst_29 {dimension_numbers = #tpu.dot_dimension_numbers<[1], [0], [0], [1], [0, 0, 1, 1], [], []>} : vector<8x32xf32>, vector<32x128xf32>, vector<8x128xf32> -> vector<8x128xf32>
    %124 = vector.extract_strided_slice %122 {offsets = [0, 0], sizes = [8, 128], strides = [1, 1]} : vector<8x256xf32> to vector<8x128xf32>
    %c8_i32_30 = arith.constant 8 : i32
    %125 = arith.muli %c3_i32, %c8_i32_30 : i32
    %126 = tpu.assume_multiple %125, 8 : i32
    %127 = arith.index_cast %126 : i32 to index
    %c0_31 = arith.constant 0 : index
    %128 = vector.load %arg12[%127, %c0_31] : memref<64x128xf32, #tpu.memory_space<vmem>>, vector<8x128xf32>
    %129 = arith.addf %124, %128 : vector<8x128xf32>
    %130 = math.tanh %129 : vector<8x128xf32>
    %131 = vector.broadcast %8 : vector<1x128xf32> to vector<8x128xf32>
    %132 = arith.mulf %130, %131 : vector<8x128xf32>
    %133 = vector.broadcast %11 : vector<1x128xf32> to vector<8x128xf32>
    %134 = arith.addf %132, %133 : vector<8x128xf32>
    %135 = vector.extract_strided_slice %134 {offsets = [0, 0], sizes = [8, 32], strides = [1, 1]} : vector<8x128xf32> to vector<8x32xf32>
    %136 = vector.extract_strided_slice %134 {offsets = [0, 32], sizes = [8, 32], strides = [1, 1]} : vector<8x128xf32> to vector<8x32xf32>
    %137 = vector.extract_strided_slice %134 {offsets = [0, 64], sizes = [8, 32], strides = [1, 1]} : vector<8x128xf32> to vector<8x32xf32>
    %138 = vector.extract_strided_slice %134 {offsets = [0, 96], sizes = [8, 32], strides = [1, 1]} : vector<8x128xf32> to vector<8x32xf32>
    %139 = arith.mulf %136, %100 : vector<8x32xf32>
    %140 = arith.mulf %135, %137 : vector<8x32xf32>
    %141 = arith.addf %139, %140 : vector<8x32xf32>
    %142 = math.tanh %141 : vector<8x32xf32>
    %143 = arith.mulf %138, %142 : vector<8x32xf32>
    %144 = vector.extract_strided_slice %122 {offsets = [0, 128], sizes = [8, 128], strides = [1, 1]} : vector<8x256xf32> to vector<8x128xf32>
    %145 = arith.addf %123, %144 : vector<8x128xf32>
    %c0_32 = arith.constant 0 : index
    %c0_33 = arith.constant 0 : index
    %146 = vector.load %arg6[%c0_32, %c0_33] : memref<1x128xf32, #tpu.memory_space<vmem>>, vector<1x128xf32>
    %147 = vector.broadcast %146 : vector<1x128xf32> to vector<8x128xf32>
    %148 = arith.addf %145, %147 : vector<8x128xf32>
    %149 = math.tanh %148 : vector<8x128xf32>
    %150 = vector.broadcast %8 : vector<1x128xf32> to vector<8x128xf32>
    %151 = arith.mulf %149, %150 : vector<8x128xf32>
    %152 = vector.broadcast %11 : vector<1x128xf32> to vector<8x128xf32>
    %153 = arith.addf %151, %152 : vector<8x128xf32>
    %154 = vector.extract_strided_slice %153 {offsets = [0, 0], sizes = [8, 32], strides = [1, 1]} : vector<8x128xf32> to vector<8x32xf32>
    %155 = vector.extract_strided_slice %153 {offsets = [0, 32], sizes = [8, 32], strides = [1, 1]} : vector<8x128xf32> to vector<8x32xf32>
    %156 = vector.extract_strided_slice %153 {offsets = [0, 64], sizes = [8, 32], strides = [1, 1]} : vector<8x128xf32> to vector<8x32xf32>
    %157 = vector.extract_strided_slice %153 {offsets = [0, 96], sizes = [8, 32], strides = [1, 1]} : vector<8x128xf32> to vector<8x32xf32>
    %158 = arith.mulf %155, %119 : vector<8x32xf32>
    %159 = arith.mulf %154, %156 : vector<8x32xf32>
    %160 = arith.addf %158, %159 : vector<8x32xf32>
    %161 = math.tanh %160 : vector<8x32xf32>
    %162 = arith.mulf %157, %161 : vector<8x32xf32>
    %c4_i32 = arith.constant 4 : i32
    %cst_34 = arith.constant dense<0.000000e+00> : vector<8x256xf32>
    %163 = tpu.matmul %143, %19, %cst_34 {dimension_numbers = #tpu.dot_dimension_numbers<[1], [0], [0], [1], [0, 0, 1, 1], [], []>} : vector<8x32xf32>, vector<32x256xf32>, vector<8x256xf32> -> vector<8x256xf32>
    %cst_35 = arith.constant dense<0.000000e+00> : vector<8x128xf32>
    %164 = tpu.matmul %162, %20, %cst_35 {dimension_numbers = #tpu.dot_dimension_numbers<[1], [0], [0], [1], [0, 0, 1, 1], [], []>} : vector<8x32xf32>, vector<32x128xf32>, vector<8x128xf32> -> vector<8x128xf32>
    %165 = vector.extract_strided_slice %163 {offsets = [0, 0], sizes = [8, 128], strides = [1, 1]} : vector<8x256xf32> to vector<8x128xf32>
    %c8_i32_36 = arith.constant 8 : i32
    %166 = arith.muli %c4_i32, %c8_i32_36 : i32
    %167 = tpu.assume_multiple %166, 8 : i32
    %168 = arith.index_cast %167 : i32 to index
    %c0_37 = arith.constant 0 : index
    %169 = vector.load %arg12[%168, %c0_37] : memref<64x128xf32, #tpu.memory_space<vmem>>, vector<8x128xf32>
    %170 = arith.addf %165, %169 : vector<8x128xf32>
    %171 = math.tanh %170 : vector<8x128xf32>
    %172 = vector.broadcast %8 : vector<1x128xf32> to vector<8x128xf32>
    %173 = arith.mulf %171, %172 : vector<8x128xf32>
    %174 = vector.broadcast %11 : vector<1x128xf32> to vector<8x128xf32>
    %175 = arith.addf %173, %174 : vector<8x128xf32>
    %176 = vector.extract_strided_slice %175 {offsets = [0, 0], sizes = [8, 32], strides = [1, 1]} : vector<8x128xf32> to vector<8x32xf32>
    %177 = vector.extract_strided_slice %175 {offsets = [0, 32], sizes = [8, 32], strides = [1, 1]} : vector<8x128xf32> to vector<8x32xf32>
    %178 = vector.extract_strided_slice %175 {offsets = [0, 64], sizes = [8, 32], strides = [1, 1]} : vector<8x128xf32> to vector<8x32xf32>
    %179 = vector.extract_strided_slice %175 {offsets = [0, 96], sizes = [8, 32], strides = [1, 1]} : vector<8x128xf32> to vector<8x32xf32>
    %180 = arith.mulf %177, %141 : vector<8x32xf32>
    %181 = arith.mulf %176, %178 : vector<8x32xf32>
    %182 = arith.addf %180, %181 : vector<8x32xf32>
    %183 = math.tanh %182 : vector<8x32xf32>
    %184 = arith.mulf %179, %183 : vector<8x32xf32>
    %185 = vector.extract_strided_slice %163 {offsets = [0, 128], sizes = [8, 128], strides = [1, 1]} : vector<8x256xf32> to vector<8x128xf32>
    %186 = arith.addf %164, %185 : vector<8x128xf32>
    %c0_38 = arith.constant 0 : index
    %c0_39 = arith.constant 0 : index
    %187 = vector.load %arg6[%c0_38, %c0_39] : memref<1x128xf32, #tpu.memory_space<vmem>>, vector<1x128xf32>
    %188 = vector.broadcast %187 : vector<1x128xf32> to vector<8x128xf32>
    %189 = arith.addf %186, %188 : vector<8x128xf32>
    %190 = math.tanh %189 : vector<8x128xf32>
    %191 = vector.broadcast %8 : vector<1x128xf32> to vector<8x128xf32>
    %192 = arith.mulf %190, %191 : vector<8x128xf32>
    %193 = vector.broadcast %11 : vector<1x128xf32> to vector<8x128xf32>
    %194 = arith.addf %192, %193 : vector<8x128xf32>
    %195 = vector.extract_strided_slice %194 {offsets = [0, 0], sizes = [8, 32], strides = [1, 1]} : vector<8x128xf32> to vector<8x32xf32>
    %196 = vector.extract_strided_slice %194 {offsets = [0, 32], sizes = [8, 32], strides = [1, 1]} : vector<8x128xf32> to vector<8x32xf32>
    %197 = vector.extract_strided_slice %194 {offsets = [0, 64], sizes = [8, 32], strides = [1, 1]} : vector<8x128xf32> to vector<8x32xf32>
    %198 = vector.extract_strided_slice %194 {offsets = [0, 96], sizes = [8, 32], strides = [1, 1]} : vector<8x128xf32> to vector<8x32xf32>
    %199 = arith.mulf %196, %160 : vector<8x32xf32>
    %200 = arith.mulf %195, %197 : vector<8x32xf32>
    %201 = arith.addf %199, %200 : vector<8x32xf32>
    %202 = math.tanh %201 : vector<8x32xf32>
    %203 = arith.mulf %198, %202 : vector<8x32xf32>
    %c5_i32 = arith.constant 5 : i32
    %cst_40 = arith.constant dense<0.000000e+00> : vector<8x256xf32>
    %204 = tpu.matmul %184, %19, %cst_40 {dimension_numbers = #tpu.dot_dimension_numbers<[1], [0], [0], [1], [0, 0, 1, 1], [], []>} : vector<8x32xf32>, vector<32x256xf32>, vector<8x256xf32> -> vector<8x256xf32>
    %cst_41 = arith.constant dense<0.000000e+00> : vector<8x128xf32>
    %205 = tpu.matmul %203, %20, %cst_41 {dimension_numbers = #tpu.dot_dimension_numbers<[1], [0], [0], [1], [0, 0, 1, 1], [], []>} : vector<8x32xf32>, vector<32x128xf32>, vector<8x128xf32> -> vector<8x128xf32>
    %206 = vector.extract_strided_slice %204 {offsets = [0, 0], sizes = [8, 128], strides = [1, 1]} : vector<8x256xf32> to vector<8x128xf32>
    %c8_i32_42 = arith.constant 8 : i32
    %207 = arith.muli %c5_i32, %c8_i32_42 : i32
    %208 = tpu.assume_multiple %207, 8 : i32
    %209 = arith.index_cast %208 : i32 to index
    %c0_43 = arith.constant 0 : index
    %210 = vector.load %arg12[%209, %c0_43] : memref<64x128xf32, #tpu.memory_space<vmem>>, vector<8x128xf32>
    %211 = arith.addf %206, %210 : vector<8x128xf32>
    %212 = math.tanh %211 : vector<8x128xf32>
    %213 = vector.broadcast %8 : vector<1x128xf32> to vector<8x128xf32>
    %214 = arith.mulf %212, %213 : vector<8x128xf32>
    %215 = vector.broadcast %11 : vector<1x128xf32> to vector<8x128xf32>
    %216 = arith.addf %214, %215 : vector<8x128xf32>
    %217 = vector.extract_strided_slice %216 {offsets = [0, 0], sizes = [8, 32], strides = [1, 1]} : vector<8x128xf32> to vector<8x32xf32>
    %218 = vector.extract_strided_slice %216 {offsets = [0, 32], sizes = [8, 32], strides = [1, 1]} : vector<8x128xf32> to vector<8x32xf32>
    %219 = vector.extract_strided_slice %216 {offsets = [0, 64], sizes = [8, 32], strides = [1, 1]} : vector<8x128xf32> to vector<8x32xf32>
    %220 = vector.extract_strided_slice %216 {offsets = [0, 96], sizes = [8, 32], strides = [1, 1]} : vector<8x128xf32> to vector<8x32xf32>
    %221 = arith.mulf %218, %182 : vector<8x32xf32>
    %222 = arith.mulf %217, %219 : vector<8x32xf32>
    %223 = arith.addf %221, %222 : vector<8x32xf32>
    %224 = math.tanh %223 : vector<8x32xf32>
    %225 = arith.mulf %220, %224 : vector<8x32xf32>
    %226 = vector.extract_strided_slice %204 {offsets = [0, 128], sizes = [8, 128], strides = [1, 1]} : vector<8x256xf32> to vector<8x128xf32>
    %227 = arith.addf %205, %226 : vector<8x128xf32>
    %c0_44 = arith.constant 0 : index
    %c0_45 = arith.constant 0 : index
    %228 = vector.load %arg6[%c0_44, %c0_45] : memref<1x128xf32, #tpu.memory_space<vmem>>, vector<1x128xf32>
    %229 = vector.broadcast %228 : vector<1x128xf32> to vector<8x128xf32>
    %230 = arith.addf %227, %229 : vector<8x128xf32>
    %231 = math.tanh %230 : vector<8x128xf32>
    %232 = vector.broadcast %8 : vector<1x128xf32> to vector<8x128xf32>
    %233 = arith.mulf %231, %232 : vector<8x128xf32>
    %234 = vector.broadcast %11 : vector<1x128xf32> to vector<8x128xf32>
    %235 = arith.addf %233, %234 : vector<8x128xf32>
    %236 = vector.extract_strided_slice %235 {offsets = [0, 0], sizes = [8, 32], strides = [1, 1]} : vector<8x128xf32> to vector<8x32xf32>
    %237 = vector.extract_strided_slice %235 {offsets = [0, 32], sizes = [8, 32], strides = [1, 1]} : vector<8x128xf32> to vector<8x32xf32>
    %238 = vector.extract_strided_slice %235 {offsets = [0, 64], sizes = [8, 32], strides = [1, 1]} : vector<8x128xf32> to vector<8x32xf32>
    %239 = vector.extract_strided_slice %235 {offsets = [0, 96], sizes = [8, 32], strides = [1, 1]} : vector<8x128xf32> to vector<8x32xf32>
    %240 = arith.mulf %237, %201 : vector<8x32xf32>
    %241 = arith.mulf %236, %238 : vector<8x32xf32>
    %242 = arith.addf %240, %241 : vector<8x32xf32>
    %243 = math.tanh %242 : vector<8x32xf32>
    %244 = arith.mulf %239, %243 : vector<8x32xf32>
    %c6_i32 = arith.constant 6 : i32
    %cst_46 = arith.constant dense<0.000000e+00> : vector<8x256xf32>
    %245 = tpu.matmul %225, %19, %cst_46 {dimension_numbers = #tpu.dot_dimension_numbers<[1], [0], [0], [1], [0, 0, 1, 1], [], []>} : vector<8x32xf32>, vector<32x256xf32>, vector<8x256xf32> -> vector<8x256xf32>
    %cst_47 = arith.constant dense<0.000000e+00> : vector<8x128xf32>
    %246 = tpu.matmul %244, %20, %cst_47 {dimension_numbers = #tpu.dot_dimension_numbers<[1], [0], [0], [1], [0, 0, 1, 1], [], []>} : vector<8x32xf32>, vector<32x128xf32>, vector<8x128xf32> -> vector<8x128xf32>
    %247 = vector.extract_strided_slice %245 {offsets = [0, 0], sizes = [8, 128], strides = [1, 1]} : vector<8x256xf32> to vector<8x128xf32>
    %c8_i32_48 = arith.constant 8 : i32
    %248 = arith.muli %c6_i32, %c8_i32_48 : i32
    %249 = tpu.assume_multiple %248, 8 : i32
    %250 = arith.index_cast %249 : i32 to index
    %c0_49 = arith.constant 0 : index
    %251 = vector.load %arg12[%250, %c0_49] : memref<64x128xf32, #tpu.memory_space<vmem>>, vector<8x128xf32>
    %252 = arith.addf %247, %251 : vector<8x128xf32>
    %253 = math.tanh %252 : vector<8x128xf32>
    %254 = vector.broadcast %8 : vector<1x128xf32> to vector<8x128xf32>
    %255 = arith.mulf %253, %254 : vector<8x128xf32>
    %256 = vector.broadcast %11 : vector<1x128xf32> to vector<8x128xf32>
    %257 = arith.addf %255, %256 : vector<8x128xf32>
    %258 = vector.extract_strided_slice %257 {offsets = [0, 0], sizes = [8, 32], strides = [1, 1]} : vector<8x128xf32> to vector<8x32xf32>
    %259 = vector.extract_strided_slice %257 {offsets = [0, 32], sizes = [8, 32], strides = [1, 1]} : vector<8x128xf32> to vector<8x32xf32>
    %260 = vector.extract_strided_slice %257 {offsets = [0, 64], sizes = [8, 32], strides = [1, 1]} : vector<8x128xf32> to vector<8x32xf32>
    %261 = vector.extract_strided_slice %257 {offsets = [0, 96], sizes = [8, 32], strides = [1, 1]} : vector<8x128xf32> to vector<8x32xf32>
    %262 = arith.mulf %259, %223 : vector<8x32xf32>
    %263 = arith.mulf %258, %260 : vector<8x32xf32>
    %264 = arith.addf %262, %263 : vector<8x32xf32>
    %265 = math.tanh %264 : vector<8x32xf32>
    %266 = arith.mulf %261, %265 : vector<8x32xf32>
    %267 = vector.extract_strided_slice %245 {offsets = [0, 128], sizes = [8, 128], strides = [1, 1]} : vector<8x256xf32> to vector<8x128xf32>
    %268 = arith.addf %246, %267 : vector<8x128xf32>
    %c0_50 = arith.constant 0 : index
    %c0_51 = arith.constant 0 : index
    %269 = vector.load %arg6[%c0_50, %c0_51] : memref<1x128xf32, #tpu.memory_space<vmem>>, vector<1x128xf32>
    %270 = vector.broadcast %269 : vector<1x128xf32> to vector<8x128xf32>
    %271 = arith.addf %268, %270 : vector<8x128xf32>
    %272 = math.tanh %271 : vector<8x128xf32>
    %273 = vector.broadcast %8 : vector<1x128xf32> to vector<8x128xf32>
    %274 = arith.mulf %272, %273 : vector<8x128xf32>
    %275 = vector.broadcast %11 : vector<1x128xf32> to vector<8x128xf32>
    %276 = arith.addf %274, %275 : vector<8x128xf32>
    %277 = vector.extract_strided_slice %276 {offsets = [0, 0], sizes = [8, 32], strides = [1, 1]} : vector<8x128xf32> to vector<8x32xf32>
    %278 = vector.extract_strided_slice %276 {offsets = [0, 32], sizes = [8, 32], strides = [1, 1]} : vector<8x128xf32> to vector<8x32xf32>
    %279 = vector.extract_strided_slice %276 {offsets = [0, 64], sizes = [8, 32], strides = [1, 1]} : vector<8x128xf32> to vector<8x32xf32>
    %280 = vector.extract_strided_slice %276 {offsets = [0, 96], sizes = [8, 32], strides = [1, 1]} : vector<8x128xf32> to vector<8x32xf32>
    %281 = arith.mulf %278, %242 : vector<8x32xf32>
    %282 = arith.mulf %277, %279 : vector<8x32xf32>
    %283 = arith.addf %281, %282 : vector<8x32xf32>
    %284 = math.tanh %283 : vector<8x32xf32>
    %285 = arith.mulf %280, %284 : vector<8x32xf32>
    %c7_i32 = arith.constant 7 : i32
    %cst_52 = arith.constant dense<0.000000e+00> : vector<8x256xf32>
    %286 = tpu.matmul %266, %19, %cst_52 {dimension_numbers = #tpu.dot_dimension_numbers<[1], [0], [0], [1], [0, 0, 1, 1], [], []>} : vector<8x32xf32>, vector<32x256xf32>, vector<8x256xf32> -> vector<8x256xf32>
    %cst_53 = arith.constant dense<0.000000e+00> : vector<8x128xf32>
    %287 = tpu.matmul %285, %20, %cst_53 {dimension_numbers = #tpu.dot_dimension_numbers<[1], [0], [0], [1], [0, 0, 1, 1], [], []>} : vector<8x32xf32>, vector<32x128xf32>, vector<8x128xf32> -> vector<8x128xf32>
    %288 = vector.extract_strided_slice %286 {offsets = [0, 0], sizes = [8, 128], strides = [1, 1]} : vector<8x256xf32> to vector<8x128xf32>
    %c8_i32_54 = arith.constant 8 : i32
    %289 = arith.muli %c7_i32, %c8_i32_54 : i32
    %290 = tpu.assume_multiple %289, 8 : i32
    %291 = arith.index_cast %290 : i32 to index
    %c0_55 = arith.constant 0 : index
    %292 = vector.load %arg12[%291, %c0_55] : memref<64x128xf32, #tpu.memory_space<vmem>>, vector<8x128xf32>
    %293 = arith.addf %288, %292 : vector<8x128xf32>
    %294 = math.tanh %293 : vector<8x128xf32>
    %295 = vector.broadcast %8 : vector<1x128xf32> to vector<8x128xf32>
    %296 = arith.mulf %294, %295 : vector<8x128xf32>
    %297 = vector.broadcast %11 : vector<1x128xf32> to vector<8x128xf32>
    %298 = arith.addf %296, %297 : vector<8x128xf32>
    %299 = vector.extract_strided_slice %298 {offsets = [0, 0], sizes = [8, 32], strides = [1, 1]} : vector<8x128xf32> to vector<8x32xf32>
    %300 = vector.extract_strided_slice %298 {offsets = [0, 32], sizes = [8, 32], strides = [1, 1]} : vector<8x128xf32> to vector<8x32xf32>
    %301 = vector.extract_strided_slice %298 {offsets = [0, 64], sizes = [8, 32], strides = [1, 1]} : vector<8x128xf32> to vector<8x32xf32>
    %302 = vector.extract_strided_slice %298 {offsets = [0, 96], sizes = [8, 32], strides = [1, 1]} : vector<8x128xf32> to vector<8x32xf32>
    %303 = arith.mulf %300, %264 : vector<8x32xf32>
    %304 = arith.mulf %299, %301 : vector<8x32xf32>
    %305 = arith.addf %303, %304 : vector<8x32xf32>
    %306 = math.tanh %305 : vector<8x32xf32>
    %307 = arith.mulf %302, %306 : vector<8x32xf32>
    %308 = vector.extract_strided_slice %286 {offsets = [0, 128], sizes = [8, 128], strides = [1, 1]} : vector<8x256xf32> to vector<8x128xf32>
    %309 = arith.addf %287, %308 : vector<8x128xf32>
    %c0_56 = arith.constant 0 : index
    %c0_57 = arith.constant 0 : index
    %310 = vector.load %arg6[%c0_56, %c0_57] : memref<1x128xf32, #tpu.memory_space<vmem>>, vector<1x128xf32>
    %311 = vector.broadcast %310 : vector<1x128xf32> to vector<8x128xf32>
    %312 = arith.addf %309, %311 : vector<8x128xf32>
    %313 = math.tanh %312 : vector<8x128xf32>
    %314 = vector.broadcast %8 : vector<1x128xf32> to vector<8x128xf32>
    %315 = arith.mulf %313, %314 : vector<8x128xf32>
    %316 = vector.broadcast %11 : vector<1x128xf32> to vector<8x128xf32>
    %317 = arith.addf %315, %316 : vector<8x128xf32>
    %318 = vector.extract_strided_slice %317 {offsets = [0, 0], sizes = [8, 32], strides = [1, 1]} : vector<8x128xf32> to vector<8x32xf32>
    %319 = vector.extract_strided_slice %317 {offsets = [0, 32], sizes = [8, 32], strides = [1, 1]} : vector<8x128xf32> to vector<8x32xf32>
    %320 = vector.extract_strided_slice %317 {offsets = [0, 64], sizes = [8, 32], strides = [1, 1]} : vector<8x128xf32> to vector<8x32xf32>
    %321 = vector.extract_strided_slice %317 {offsets = [0, 96], sizes = [8, 32], strides = [1, 1]} : vector<8x128xf32> to vector<8x32xf32>
    %322 = arith.mulf %319, %283 : vector<8x32xf32>
    %323 = arith.mulf %318, %320 : vector<8x32xf32>
    %324 = arith.addf %322, %323 : vector<8x32xf32>
    %325 = math.tanh %324 : vector<8x32xf32>
    %326 = arith.mulf %321, %325 : vector<8x32xf32>
    %c7_i32_58 = arith.constant 7 : i32
    %cst_59 = arith.constant dense<0.000000e+00> : vector<8x256xf32>
    %327 = tpu.matmul %307, %19, %cst_59 {dimension_numbers = #tpu.dot_dimension_numbers<[1], [0], [0], [1], [0, 0, 1, 1], [], []>} : vector<8x32xf32>, vector<32x256xf32>, vector<8x256xf32> -> vector<8x256xf32>
    %cst_60 = arith.constant dense<0.000000e+00> : vector<8x128xf32>
    %328 = tpu.matmul %326, %20, %cst_60 {dimension_numbers = #tpu.dot_dimension_numbers<[1], [0], [0], [1], [0, 0, 1, 1], [], []>} : vector<8x32xf32>, vector<32x128xf32>, vector<8x128xf32> -> vector<8x128xf32>
    %329 = vector.extract_strided_slice %327 {offsets = [0, 128], sizes = [8, 128], strides = [1, 1]} : vector<8x256xf32> to vector<8x128xf32>
    %330 = arith.addf %328, %329 : vector<8x128xf32>
    %c0_61 = arith.constant 0 : index
    %c0_62 = arith.constant 0 : index
    %331 = vector.load %arg6[%c0_61, %c0_62] : memref<1x128xf32, #tpu.memory_space<vmem>>, vector<1x128xf32>
    %332 = vector.broadcast %331 : vector<1x128xf32> to vector<8x128xf32>
    %333 = arith.addf %330, %332 : vector<8x128xf32>
    %334 = math.tanh %333 : vector<8x128xf32>
    %335 = vector.broadcast %8 : vector<1x128xf32> to vector<8x128xf32>
    %336 = arith.mulf %334, %335 : vector<8x128xf32>
    %337 = vector.broadcast %11 : vector<1x128xf32> to vector<8x128xf32>
    %338 = arith.addf %336, %337 : vector<8x128xf32>
    %339 = vector.extract_strided_slice %338 {offsets = [0, 0], sizes = [8, 32], strides = [1, 1]} : vector<8x128xf32> to vector<8x32xf32>
    %340 = vector.extract_strided_slice %338 {offsets = [0, 32], sizes = [8, 32], strides = [1, 1]} : vector<8x128xf32> to vector<8x32xf32>
    %341 = vector.extract_strided_slice %338 {offsets = [0, 64], sizes = [8, 32], strides = [1, 1]} : vector<8x128xf32> to vector<8x32xf32>
    %342 = vector.extract_strided_slice %338 {offsets = [0, 96], sizes = [8, 32], strides = [1, 1]} : vector<8x128xf32> to vector<8x32xf32>
    %343 = arith.mulf %340, %324 : vector<8x32xf32>
    %344 = arith.mulf %339, %341 : vector<8x32xf32>
    %345 = arith.addf %343, %344 : vector<8x32xf32>
    %346 = math.tanh %345 : vector<8x32xf32>
    %347 = arith.mulf %342, %346 : vector<8x32xf32>
    %c0_63 = arith.constant 0 : index
    %c0_64 = arith.constant 0 : index
    %348 = vector.load %arg7[%c0_63, %c0_64] : memref<32x1xf32, #tpu.memory_space<vmem>>, vector<32x1xf32>
    %cst_65 = arith.constant dense<0.000000e+00> : vector<8x1xf32>
    %349 = tpu.matmul %347, %348, %cst_65 {dimension_numbers = #tpu.dot_dimension_numbers<[1], [0], [0], [1], [0, 0, 1, 1], [], []>} : vector<8x32xf32>, vector<32x1xf32>, vector<8x1xf32> -> vector<8x1xf32>
    %c0_66 = arith.constant 0 : index
    %c0_67 = arith.constant 0 : index
    %350 = vector.load %arg1[%c0_66, %c0_67] : memref<8x1xf32, #tpu.memory_space<vmem>>, vector<8x1xf32>
    %c0_68 = arith.constant 0 : index
    %c0_69 = arith.constant 0 : index
    %351 = vector.load %arg8[%c0_68, %c0_69] : memref<1x1xf32, #tpu.memory_space<vmem>>, vector<1x1xf32>
    %352 = vector.broadcast %351 : vector<1x1xf32> to vector<8x1xf32>
    %353 = arith.mulf %350, %352 : vector<8x1xf32>
    %354 = arith.addf %349, %353 : vector<8x1xf32>
    %c0_70 = arith.constant 0 : index
    %c0_71 = arith.constant 0 : index
    %355 = vector.load %arg2[%c0_70, %c0_71] : memref<8x1xf32, #tpu.memory_space<vmem>>, vector<8x1xf32>
    %c0_72 = arith.constant 0 : index
    %c0_73 = arith.constant 0 : index
    %356 = vector.load %arg9[%c0_72, %c0_73] : memref<1x1xf32, #tpu.memory_space<vmem>>, vector<1x1xf32>
    %357 = vector.broadcast %356 : vector<1x1xf32> to vector<8x1xf32>
    %358 = arith.mulf %355, %357 : vector<8x1xf32>
    %359 = arith.addf %354, %358 : vector<8x1xf32>
    %c0_74 = arith.constant 0 : index
    %c0_75 = arith.constant 0 : index
    %360 = vector.load %arg10[%c0_74, %c0_75] : memref<1x1xf32, #tpu.memory_space<vmem>>, vector<1x1xf32>
    %361 = vector.broadcast %360 : vector<1x1xf32> to vector<8x1xf32>
    %362 = arith.addf %359, %361 : vector<8x1xf32>
    %c0_76 = arith.constant 0 : index
    %c0_77 = arith.constant 0 : index
    %363 = vector.load %arg11[%c0_76, %c0_77] : memref<8x1xf32, #tpu.memory_space<vmem>>, vector<8x1xf32>
    tpu.vector_store %arg11[%c0_76, %c0_77], %362 {strides = array<i32>} : memref<8x1xf32, #tpu.memory_space<vmem>>, vector<8x1xf32>,
    return
  }
}

</mosaic_0001>

<llo_original>
// kernel: lstm_regression_forward.1
$region0: #{lstm_regression_forward.1}
  #allocation0 [shape = 'u32[]', space=smem, size = 0x4, offset = 0x4, fixed_abs, tag = 'smem constant byte address 0x4 - core index']
  #allocation1 [shape = 'u32[144,128]{1,0:T(1,128)}', space=vmem, size = 0x12000, scoped, tag = 'internal scratch']
  #allocation2 [shape = 'f32[64,128]{1,0:T(8,128)}', space=vmem, size = 0x8000, scoped, tag = 'scratch operand']
  #allocation3 [shape = 'f32[1,1]{1,0:T(1,128)S(1)}', space=vmem, size = 0x200, scoped, tag = 'scoped memory for lstm_regression_forward.1']
  #allocation4 [shape = 'f32[1,1]{1,0:T(1,128)S(1)}', space=vmem, size = 0x200, scoped, tag = 'scoped memory for lstm_regression_forward.1']
  #allocation5 [shape = 'f32[1,1]{1,0:T(1,128)S(1)}', space=vmem, size = 0x200, scoped, tag = 'scoped memory for lstm_regression_forward.1']
  %s0 = inlined_call_operand.vmem [shape: f32[64,4], index: 0, kind: input, shape index: {}]
  %s1 = inlined_call_operand.vmem [shape: f32[8,1], index: 1, kind: input, shape index: {}]
  %s2 = inlined_call_operand.vmem [shape: f32[8,1], index: 2, kind: input, shape index: {}]
  %s3 = inlined_call_operand.vmem [shape: f32[4,128], index: 3, kind: input, shape index: {}]
  %s4 = inlined_call_operand.vmem [shape: f32[1,128], index: 4, kind: input, shape index: {}]
  %s5 = inlined_call_operand.vmem [shape: f32[64,256], index: 5, kind: input, shape index: {}]
  %s6 = inlined_call_operand.vmem [shape: f32[1,128], index: 6, kind: input, shape index: {}]
  %s7 = inlined_call_operand.vmem [shape: f32[32,1], index: 7, kind: input, shape index: {}]
  %s8 = inlined_call_operand.<no memory space> [shape: f32[1,1], index: 8, kind: input, shape index: {}]
  %s9 = inlined_call_operand.<no memory space> [shape: f32[1,1], index: 9, kind: input, shape index: {}]
  %s10 = inlined_call_operand.<no memory space> [shape: f32[1,1], index: 10, kind: input, shape index: {}]
  %s11 = inlined_call_operand.vmem [shape: f32[8,1], index: 11, kind: output, shape index: {}]
  %s12 = sld [smem:[#allocation0]]
  $region54: #{lstm_regression_forward.1} parent=0
    _
  %s14 = ssub.s32 1, %s12
  %s15 = scalar_select 0, %s14, %s12
  %v16 = vstv %s8
  %17 = vst [vmem:[#allocation3] sm:$0x1] %v16
  %v18 = vstv %s9
  %19 = vst [vmem:[#allocation4] sm:$0x1] %v18
  %v20 = vstv %s10
  %21 = vst [vmem:[#allocation5] sm:$0x1] %v20
  // Predicated region
  $region2: #{lstm_regression_forward.1} parent=0 // pred_check
    _
  $region3: #{lstm_regression_forward.1} parent=0 // pred_check_branch
    %23 = sbr.rel (0) target = $region5
  $region4: #{lstm_regression_forward.1} parent=0 // pred_region
    _
  $region5: #{lstm_regression_forward.1} parent=0 // pred_fallthru
    _
  // Predicated region
  $region6: #{lstm_regression_forward.1} parent=0 // pred_check
    _
  $region7: #{lstm_regression_forward.1} parent=0 // pred_check_branch
    %25 = sbr.rel (0) target = $region9
  $region8: #{lstm_regression_forward.1} parent=0 // pred_region
    _
  $region9: #{lstm_regression_forward.1} parent=0 // pred_fallthru
    _
  // Predicated region
  $region10: #{lstm_regression_forward.1} parent=0 // pred_check
    _
  $region11: #{lstm_regression_forward.1} parent=0 // pred_check_branch
    %27 = sbr.rel (0) target = $region13
  $region12: #{lstm_regression_forward.1} parent=0 // pred_region
    _
  $region13: #{lstm_regression_forward.1} parent=0 // pred_fallthru
    _
  // Predicated region
  $region14: #{lstm_regression_forward.1} parent=0 // pred_check
    _
  $region15: #{lstm_regression_forward.1} parent=0 // pred_check_branch
    %29 = sbr.rel (0) target = $region17
  $region16: #{lstm_regression_forward.1} parent=0 // pred_region
    _
  $region17: #{lstm_regression_forward.1} parent=0 // pred_fallthru
    _
  // Predicated region
  $region18: #{lstm_regression_forward.1} parent=0 // pred_check
    _
  $region19: #{lstm_regression_forward.1} parent=0 // pred_check_branch
    %31 = sbr.rel (0) target = $region21
  $region20: #{lstm_regression_forward.1} parent=0 // pred_region
    _
  $region21: #{lstm_regression_forward.1} parent=0 // pred_fallthru
    _
  // Predicated region
  $region22: #{lstm_regression_forward.1} parent=0 // pred_check
    _
  $region23: #{lstm_regression_forward.1} parent=0 // pred_check_branch
    %33 = sbr.rel (0) target = $region25
  $region24: #{lstm_regression_forward.1} parent=0 // pred_region
    _
  $region25: #{lstm_regression_forward.1} parent=0 // pred_fallthru
    _
  // Predicated region
  $region26: #{lstm_regression_forward.1} parent=0 // pred_check
    _
  $region27: #{lstm_regression_forward.1} parent=0 // pred_check_branch
    %35 = sbr.rel (0) target = $region29
  $region28: #{lstm_regression_forward.1} parent=0 // pred_region
    _
  $region29: #{lstm_regression_forward.1} parent=0 // pred_fallthru
    _
  // Predicated region
  $region30: #{lstm_regression_forward.1} parent=0 // pred_check
    _
  $region31: #{lstm_regression_forward.1} parent=0 // pred_check_branch
    %37 = sbr.rel (0) target = $region33
  $region32: #{lstm_regression_forward.1} parent=0 // pred_region
    _
  $region33: #{lstm_regression_forward.1} parent=0 // pred_fallthru
    _
  // Predicated region
  $region34: #{lstm_regression_forward.1} parent=0 // pred_check
    _
  $region35: #{lstm_regression_forward.1} parent=0 // pred_check_branch
    %39 = sbr.rel (0) target = $region37
  $region36: #{lstm_regression_forward.1} parent=0 // pred_region
    _
  $region37: #{lstm_regression_forward.1} parent=0 // pred_fallthru
    _
  // Predicated region
  $region38: #{lstm_regression_forward.1} parent=0 // pred_check
    _
  $region39: #{lstm_regression_forward.1} parent=0 // pred_check_branch
    %41 = sbr.rel (0) target = $region41
  $region40: #{lstm_regression_forward.1} parent=0 // pred_region
    _
  $region41: #{lstm_regression_forward.1} parent=0 // pred_fallthru
    _
  // Predicated region
  $region42: #{lstm_regression_forward.1} parent=0 // pred_check
    _
  $region43: #{lstm_regression_forward.1} parent=0 // pred_check_branch
    %43 = sbr.rel (0) target = $region45
  $region44: #{lstm_regression_forward.1} parent=0 // pred_region
    _
  $region45: #{lstm_regression_forward.1} parent=0 // pred_fallthru
    _
  %v44 = vlaneseq
  %v45 = vand.u32 %v44, 127
  %vm46 = vcmp.ge.s32.totalorder %v45, 64
  %vm47 = vcmp.lt.s32.totalorder %v45, 96
  %vm48 = vmand %vm46, %vm47
  %v49 = vsel %vm48, 1.0, 0.5
  %v50 = vsel %vm48, 0.0, 0.5
  %v51 = vld [vmem:[%s0] sm:$0xff]
  %v52 = vld [vmem:[%s0 + $0x8] sm:$0xff]
  %v53 = vld [vmem:[%s0 + $0x10] sm:$0xff]
  %v54 = vld [vmem:[%s0 + $0x18] sm:$0xff]
  %v55 = vld [vmem:[%s0 + $0x20] sm:$0xff]
  %v56 = vld [vmem:[%s0 + $0x28] sm:$0xff]
  %v57 = vld [vmem:[%s0 + $0x30] sm:$0xff]
  %v58 = vld [vmem:[%s0 + $0x38] sm:$0xff]
  %v59 = vld [vmem:[%s3] sm:$0xf]
  %v60 = vld [vmem:[%s4] sm:$0x1]
  %v62 = vlaneseq
  %v63 = vshrl.u32 %v62, 7
  %v64 = vsub.s32 0, %v63
  %v65 = vrot.slane %v60, %v64
  %vm67 = vcmask 31744
  %v69 = vsel %vm67, %v51, 0
  %v72 = vsel %vm67, %v52, 0
  %v75 = vsel %vm67, %v53, 0
  %v78 = vsel %vm67, %v54, 0
  %v81 = vsel %vm67, %v55, 0
  %v84 = vsel %vm67, %v56, 0
  %v87 = vsel %vm67, %v57, 0
  %v90 = vsel %vm67, %v58, 0
  %vm92 = vcmask 1043456
  %v94 = vsel %vm92, %v59, 0
  %96 = vmatprep.subr.mxu0 0.0
  %97 = vmatpush1.msra.mxu0 %v94
  %98 = vmatprep.subr.mxu0 0.0
  %99 = vmatpush1.msra.mxu0 0.0
  %100 = vmatprep.subr.mxu0 0.0
  %101 = vmatpush1.msra.mxu0 0.0
  %102 = vmatprep.subr.mxu0 0.0
  %103 = vmatpush1.msra.mxu0 0.0
  %104 = vmatprep.subr.mxu0 0.0
  %105 = vmatpush1.msra.mxu0 0.0
  %106 = vmatprep.subr.mxu0 0.0
  %107 = vmatpush1.msra.mxu0 0.0
  %108 = vmatprep.subr.mxu0 0.0
  %109 = vmatpush1.msra.mxu0 0.0
  %110 = vmatprep.subr.mxu0 0.0
  %111 = vmatpush1.msra.mxu0 0.0
  %112 = vmatprep.subr.mxu0 0.0
  %113 = vmatpush1.msra.mxu0 0.0
  %114 = vmatprep.subr.mxu0 0.0
  %115 = vmatpush1.msra.mxu0 0.0
  %116 = vmatprep.subr.mxu0 0.0
  %117 = vmatpush1.msra.mxu0 0.0
  %118 = vmatprep.subr.mxu0 0.0
  %119 = vmatpush1.msra.mxu0 0.0
  %120 = vmatprep.subr.mxu0 0.0
  %121 = vmatpush1.msra.mxu0 0.0
  %122 = vmatprep.subr.mxu0 0.0
  %123 = vmatpush1.msra.mxu0 0.0
  %124 = vmatprep.subr.mxu0 0.0
  %125 = vmatpush1.msra.mxu0 0.0
  %126 = vmatprep.subr.mxu0 0.0
  %127 = vmatpush1.msra.mxu0 0.0
  %128 = vmatprep.subr.mxu0 0.0
  %129 = vmatpush1.msra.mxu0 0.0
  %130 = vmatprep.subr.mxu0 0.0
  %131 = vmatpush1.msra.mxu0 0.0
  %132 = vmatprep.subr.mxu0 0.0
  %133 = vmatpush1.msra.mxu0 0.0
  %134 = vmatprep.subr.mxu0 0.0
  %135 = vmatpush1.msra.mxu0 0.0
  %136 = vmatprep.subr.mxu0 0.0
  %137 = vmatpush1.msra.mxu0 0.0
  %138 = vmatprep.subr.mxu0 0.0
  %139 = vmatpush1.msra.mxu0 0.0
  %140 = vmatprep.subr.mxu0 0.0
  %141 = vmatpush1.msra.mxu0 0.0
  %142 = vmatprep.subr.mxu0 0.0
  %143 = vmatpush1.msra.mxu0 0.0
  %144 = vmatprep.subr.mxu0 0.0
  %145 = vmatpush1.msra.mxu0 0.0
  %146 = vmatprep.subr.mxu0 0.0
  %147 = vmatpush1.msra.mxu0 0.0
  %148 = vmatprep.subr.mxu0 0.0
  %149 = vmatpush1.msra.mxu0 0.0
  %150 = vmatprep.subr.mxu0 0.0
  %151 = vmatpush1.msra.mxu0 0.0
  %152 = vmatprep.subr.mxu0 0.0
  %153 = vmatpush1.msra.mxu0 0.0
  %154 = vmatprep.subr.mxu0 0.0
  %155 = vmatpush1.msra.mxu0 0.0
  %156 = vmatprep.subr.mxu0 0.0
  %157 = vmatpush1.msra.mxu0 0.0
  %158 = vmatprep.subr.mxu0 0.0
  %159 = vmatpush1.msra.mxu0 0.0
  %160 = vmatprep.mubr.f32.mxu0 0.0
  %161 = vmatmul.mubr.f32.gmra.mrb[0].mxu0 %v69
  %v162 = vpop.f32.mrb[0].mxu0
  %v163 = vadd.f32 %v65, %v162
  %v164 = vpop.f32.mrb[0].mxu0
  %165 = vmatprep.mubr.f32.mxu0 0.0
  %166 = vmatmul.mubr.f32.gmra.mrb[0].mxu0 %v72
  %v167 = vpop.f32.mrb[0].mxu0
  %v168 = vadd.f32 %v65, %v167
  %v169 = vpop.f32.mrb[0].mxu0
  %170 = vmatprep.mubr.f32.mxu0 0.0
  %171 = vmatmul.mubr.f32.gmra.mrb[0].mxu0 %v75
  %v172 = vpop.f32.mrb[0].mxu0
  %v173 = vadd.f32 %v65, %v172
  %v174 = vpop.f32.mrb[0].mxu0
  %175 = vmatprep.mubr.f32.mxu0 0.0
  %176 = vmatmul.mubr.f32.gmra.mrb[0].mxu0 %v78
  %v177 = vpop.f32.mrb[0].mxu0
  %v178 = vadd.f32 %v65, %v177
  %v179 = vpop.f32.mrb[0].mxu0
  %180 = vmatprep.mubr.f32.mxu0 0.0
  %181 = vmatmul.mubr.f32.gmra.mrb[0].mxu0 %v81
  %v182 = vpop.f32.mrb[0].mxu0
  %v183 = vadd.f32 %v65, %v182
  %v184 = vpop.f32.mrb[0].mxu0
  %185 = vmatprep.mubr.f32.mxu0 0.0
  %186 = vmatmul.mubr.f32.gmra.mrb[0].mxu0 %v84
  %v187 = vpop.f32.mrb[0].mxu0
  %v188 = vadd.f32 %v65, %v187
  %v189 = vpop.f32.mrb[0].mxu0
  %190 = vmatprep.mubr.f32.mxu0 0.0
  %191 = vmatmul.mubr.f32.gmra.mrb[0].mxu0 %v87
  %v192 = vpop.f32.mrb[0].mxu0
  %v193 = vadd.f32 %v65, %v192
  %v194 = vpop.f32.mrb[0].mxu0
  %195 = vmatprep.mubr.f32.mxu0 0.0
  %196 = vmatmul.mubr.f32.gmra.mrb[0].mxu0 %v90
  %v197 = vpop.f32.mrb[0].mxu0
  %v198 = vadd.f32 %v65, %v197
  %v199 = vpop.f32.mrb[0].mxu0
  %200 = vdwg.mxu0
  %201 = vst [vmem:[#allocation2] sm:$0xff] %v163
  %202 = vst [vmem:[#allocation2 + $0x8] sm:$0xff] %v168
  %203 = vst [vmem:[#allocation2 + $0x10] sm:$0xff] %v173
  %204 = vst [vmem:[#allocation2 + $0x18] sm:$0xff] %v178
  %205 = vst [vmem:[#allocation2 + $0x20] sm:$0xff] %v183
  %206 = vst [vmem:[#allocation2 + $0x28] sm:$0xff] %v188
  %207 = vst [vmem:[#allocation2 + $0x30] sm:$0xff] %v193
  %208 = vst [vmem:[#allocation2 + $0x38] sm:$0xff] %v198
  %v209 = vld [vmem:[%s5] sm:$0xff]
  %v210 = vld [vmem:[%s5 + $0x8] sm:$0xff]
  %v211 = vld [vmem:[%s5 + $0x10] sm:$0xff]
  %v212 = vld [vmem:[%s5 + $0x18] sm:$0xff]
  %v213 = vld [vmem:[%s5 + $0x20] sm:$0xff]
  %v214 = vld [vmem:[%s5 + $0x28] sm:$0xff]
  %v215 = vld [vmem:[%s5 + $0x30] sm:$0xff]
  %v216 = vld [vmem:[%s5 + $0x38] sm:$0xff]
  %v217 = vld [vmem:[%s5 + $0x48] sm:$0xff]
  %v218 = vld [vmem:[%s5 + $0x58] sm:$0xff]
  %v219 = vld [vmem:[%s5 + $0x68] sm:$0xff]
  %v220 = vld [vmem:[%s5 + $0x78] sm:$0xff]
  %vm221 = vcmask 261120
  %v223 = vsel %vm221, 0.0, 0
  %225 = vmatprep.subr.mxu0 %v210
  %226 = vmatpush1.msra.mxu0 %v209
  %227 = vmatprep.subr.mxu0 %v212
  %228 = vmatpush1.msra.mxu0 %v211
  %229 = vmatprep.subr.mxu0 %v214
  %230 = vmatpush1.msra.mxu0 %v213
  %231 = vmatprep.subr.mxu0 %v216
  %232 = vmatpush1.msra.mxu0 %v215
  %233 = vmatprep.subr.mxu0 0.0
  %234 = vmatpush1.msra.mxu0 0.0
  %235 = vmatprep.subr.mxu0 0.0
  %236 = vmatpush1.msra.mxu0 0.0
  %237 = vmatprep.subr.mxu0 0.0
  %238 = vmatpush1.msra.mxu0 0.0
  %239 = vmatprep.subr.mxu0 0.0
  %240 = vmatpush1.msra.mxu0 0.0
  %241 = vmatprep.subr.mxu0 0.0
  %242 = vmatpush1.msra.mxu0 0.0
  %243 = vmatprep.subr.mxu0 0.0
  %244 = vmatpush1.msra.mxu0 0.0
  %245 = vmatprep.subr.mxu0 0.0
  %246 = vmatpush1.msra.mxu0 0.0
  %247 = vmatprep.subr.mxu0 0.0
  %248 = vmatpush1.msra.mxu0 0.0
  %249 = vmatprep.subr.mxu0 0.0
  %250 = vmatpush1.msra.mxu0 0.0
  %251 = vmatprep.subr.mxu0 0.0
  %252 = vmatpush1.msra.mxu0 0.0
  %253 = vmatprep.subr.mxu0 0.0
  %254 = vmatpush1.msra.mxu0 0.0
  %255 = vmatprep.subr.mxu0 0.0
  %256 = vmatpush1.msra.mxu0 0.0
  %257 = vmatprep.subr.mxu0 0.0
  %258 = vmatpush1.msra.mxu0 0.0
  %259 = vmatprep.subr.mxu0 0.0
  %260 = vmatpush1.msra.mxu0 0.0
  %261 = vmatprep.subr.mxu0 0.0
  %262 = vmatpush1.msra.mxu0 0.0
  %263 = vmatprep.subr.mxu0 0.0
  %264 = vmatpush1.msra.mxu0 0.0
  %265 = vmatprep.subr.mxu0 0.0
  %266 = vmatpush1.msra.mxu0 0.0
  %267 = vmatprep.subr.mxu0 0.0
  %268 = vmatpush1.msra.mxu0 0.0
  %269 = vmatprep.subr.mxu0 0.0
  %270 = vmatpush1.msra.mxu0 0.0
  %271 = vmatprep.subr.mxu0 0.0
  %272 = vmatpush1.msra.mxu0 0.0
  %273 = vmatprep.subr.mxu0 0.0
  %274 = vmatpush1.msra.mxu0 0.0
  %275 = vmatprep.subr.mxu0 0.0
  %276 = vmatpush1.msra.mxu0 0.0
  %277 = vmatprep.subr.mxu0 0.0
  %278 = vmatpush1.msra.mxu0 0.0
  %279 = vmatprep.subr.mxu0 0.0
  %280 = vmatpush1.msra.mxu0 0.0
  %281 = vmatprep.subr.mxu0 0.0
  %282 = vmatpush1.msra.mxu0 0.0
  %283 = vmatprep.subr.mxu0 0.0
  %284 = vmatpush1.msra.mxu0 0.0
  %285 = vmatprep.subr.mxu0 0.0
  %286 = vmatpush1.msra.mxu0 0.0
  %287 = vmatprep.subr.mxu0 0.0
  %288 = vmatpush1.msra.mxu0 0.0
  %289 = vmatprep.mubr.f32.mxu0 0.0
  %290 = vmatmul.mubr.f32.gmra.mrb[0].mxu0 %v223
  %v291 = vpop.f32.mrb[0].mxu0
  %v292 = vadd.f32 0.0, %v291
  %v293 = vpop.f32.mrb[0].mxu0
  %294 = vdwg.mxu0
  %v295 = vld [vmem:[#allocation2] sm:$0xff]
  %v296 = vadd.f32 %v292, %v295
  %v297 = vtanh.pop %v296
  %v298 = vmul.f32 %v297, %v49
  %v299 = vadd.f32 %v298, %v50
  %v300 = vmul.f32 %v299, 0.0
  %302 = vrot.lane.b32.xlu0 %v299, 64
  %v303 = vpop.permute.xlu0 %302
  %v305 = vmul.f32 %v299, %v303
  %307 = vrot.lane.b32.xlu0 %v305, 32
  %v308 = vpop.permute.xlu0 %307
  %v310 = vadd.f32 %v300, %v308
  %v311 = vtanh.pop %v310
  %313 = vrot.lane.b32.xlu0 %v311, 64
  %v314 = vpop.permute.xlu0 %313
  %v316 = vmul.f32 %v299, %v314
  %318 = vrot.lane.b32.xlu0 %v316, 32
  %v319 = vpop.permute.xlu0 %318
  %v320 = vsel %vm221, %v319, 0
  %322 = vmatprep.subr.mxu0 %v210
  %323 = vmatpush1.msra.mxu0 %v209
  %324 = vmatprep.subr.mxu0 %v212
  %325 = vmatpush1.msra.mxu0 %v211
  %326 = vmatprep.subr.mxu0 %v214
  %327 = vmatpush1.msra.mxu0 %v213
  %328 = vmatprep.subr.mxu0 %v216
  %329 = vmatpush1.msra.mxu0 %v215
  %330 = vmatprep.subr.mxu0 0.0
  %331 = vmatpush1.msra.mxu0 0.0
  %332 = vmatprep.subr.mxu0 0.0
  %333 = vmatpush1.msra.mxu0 0.0
  %334 = vmatprep.subr.mxu0 0.0
  %335 = vmatpush1.msra.mxu0 0.0
  %336 = vmatprep.subr.mxu0 0.0
  %337 = vmatpush1.msra.mxu0 0.0
  %338 = vmatprep.subr.mxu0 0.0
  %339 = vmatpush1.msra.mxu0 0.0
  %340 = vmatprep.subr.mxu0 0.0
  %341 = vmatpush1.msra.mxu0 0.0
  %342 = vmatprep.subr.mxu0 0.0
  %343 = vmatpush1.msra.mxu0 0.0
  %344 = vmatprep.subr.mxu0 0.0
  %345 = vmatpush1.msra.mxu0 0.0
  %346 = vmatprep.subr.mxu0 0.0
  %347 = vmatpush1.msra.mxu0 0.0
  %348 = vmatprep.subr.mxu0 0.0
  %349 = vmatpush1.msra.mxu0 0.0
  %350 = vmatprep.subr.mxu0 0.0
  %351 = vmatpush1.msra.mxu0 0.0
  %352 = vmatprep.subr.mxu0 0.0
  %353 = vmatpush1.msra.mxu0 0.0
  %354 = vmatprep.subr.mxu0 0.0
  %355 = vmatpush1.msra.mxu0 0.0
  %356 = vmatprep.subr.mxu0 0.0
  %357 = vmatpush1.msra.mxu0 0.0
  %358 = vmatprep.subr.mxu0 0.0
  %359 = vmatpush1.msra.mxu0 0.0
  %360 = vmatprep.subr.mxu0 0.0
  %361 = vmatpush1.msra.mxu0 0.0
  %362 = vmatprep.subr.mxu0 0.0
  %363 = vmatpush1.msra.mxu0 0.0
  %364 = vmatprep.subr.mxu0 0.0
  %365 = vmatpush1.msra.mxu0 0.0
  %366 = vmatprep.subr.mxu0 0.0
  %367 = vmatpush1.msra.mxu0 0.0
  %368 = vmatprep.subr.mxu0 0.0
  %369 = vmatpush1.msra.mxu0 0.0
  %370 = vmatprep.subr.mxu0 0.0
  %371 = vmatpush1.msra.mxu0 0.0
  %372 = vmatprep.subr.mxu0 0.0
  %373 = vmatpush1.msra.mxu0 0.0
  %374 = vmatprep.subr.mxu0 0.0
  %375 = vmatpush1.msra.mxu0 0.0
  %376 = vmatprep.subr.mxu0 0.0
  %377 = vmatpush1.msra.mxu0 0.0
  %378 = vmatprep.subr.mxu0 0.0
  %379 = vmatpush1.msra.mxu0 0.0
  %380 = vmatprep.subr.mxu0 0.0
  %381 = vmatpush1.msra.mxu0 0.0
  %382 = vmatprep.subr.mxu0 0.0
  %383 = vmatpush1.msra.mxu0 0.0
  %384 = vmatprep.subr.mxu0 0.0
  %385 = vmatpush1.msra.mxu0 0.0
  %386 = vmatprep.mubr.f32.mxu0 0.0
  %387 = vmatmul.mubr.f32.gmra.mrb[0].mxu0 %v320
  %v388 = vpop.f32.mrb[0].mxu0
  %v389 = vadd.f32 0.0, %v388
  %v390 = vpop.f32.mrb[0].mxu0
  %v391 = vadd.f32 0.0, %v390
  %392 = vdwg.mxu0
  %s393 = scalar_lea.vmem [#allocation2], 8
  %v394 = vld [vmem:[%s393] sm:$0xff]
  %v395 = vadd.f32 %v389, %v394
  %v396 = vtanh.pop %v395
  %v397 = vmul.f32 %v396, %v49
  %v398 = vadd.f32 %v397, %v50
  %v399 = vmul.f32 %v398, %v310
  %401 = vrot.lane.b32.xlu0 %v398, 64
  %v402 = vpop.permute.xlu0 %401
  %v404 = vmul.f32 %v398, %v402
  %406 = vrot.lane.b32.xlu0 %v404, 32
  %v407 = vpop.permute.xlu0 %406
  %v409 = vadd.f32 %v399, %v407
  %v410 = vtanh.pop %v409
  %412 = vrot.lane.b32.xlu0 %v410, 64
  %v413 = vpop.permute.xlu0 %412
  %v415 = vmul.f32 %v398, %v413
  %416 = vmatprep.subr.mxu0 0.0
  %417 = vmatpush1.msra.mxu0 %v217
  %418 = vmatprep.subr.mxu0 0.0
  %419 = vmatpush1.msra.mxu0 %v218
  %420 = vmatprep.subr.mxu0 0.0
  %421 = vmatpush1.msra.mxu0 %v219
  %422 = vmatprep.subr.mxu0 0.0
  %423 = vmatpush1.msra.mxu0 %v220
  %424 = vmatprep.subr.mxu0 0.0
  %425 = vmatpush1.msra.mxu0 0.0
  %426 = vmatprep.subr.mxu0 0.0
  %427 = vmatpush1.msra.mxu0 0.0
  %428 = vmatprep.subr.mxu0 0.0
  %429 = vmatpush1.msra.mxu0 0.0
  %430 = vmatprep.subr.mxu0 0.0
  %431 = vmatpush1.msra.mxu0 0.0
  %432 = vmatprep.subr.mxu0 0.0
  %433 = vmatpush1.msra.mxu0 0.0
  %434 = vmatprep.subr.mxu0 0.0
  %435 = vmatpush1.msra.mxu0 0.0
  %436 = vmatprep.subr.mxu0 0.0
  %437 = vmatpush1.msra.mxu0 0.0
  %438 = vmatprep.subr.mxu0 0.0
  %439 = vmatpush1.msra.mxu0 0.0
  %440 = vmatprep.subr.mxu0 0.0
  %441 = vmatpush1.msra.mxu0 0.0
  %442 = vmatprep.subr.mxu0 0.0
  %443 = vmatpush1.msra.mxu0 0.0
  %444 = vmatprep.subr.mxu0 0.0
  %445 = vmatpush1.msra.mxu0 0.0
  %446 = vmatprep.subr.mxu0 0.0
  %447 = vmatpush1.msra.mxu0 0.0
  %448 = vmatprep.subr.mxu0 0.0
  %449 = vmatpush1.msra.mxu0 0.0
  %450 = vmatprep.subr.mxu0 0.0
  %451 = vmatpush1.msra.mxu0 0.0
  %452 = vmatprep.subr.mxu0 0.0
  %453 = vmatpush1.msra.mxu0 0.0
  %454 = vmatprep.subr.mxu0 0.0
  %455 = vmatpush1.msra.mxu0 0.0
  %456 = vmatprep.subr.mxu0 0.0
  %457 = vmatpush1.msra.mxu0 0.0
  %458 = vmatprep.subr.mxu0 0.0
  %459 = vmatpush1.msra.mxu0 0.0
  %460 = vmatprep.subr.mxu0 0.0
  %461 = vmatpush1.msra.mxu0 0.0
  %462 = vmatprep.subr.mxu0 0.0
  %463 = vmatpush1.msra.mxu0 0.0
  %464 = vmatprep.subr.mxu0 0.0
  %465 = vmatpush1.msra.mxu0 0.0
  %466 = vmatprep.subr.mxu0 0.0
  %467 = vmatpush1.msra.mxu0 0.0
  %468 = vmatprep.subr.mxu0 0.0
  %469 = vmatpush1.msra.mxu0 0.0
  %470 = vmatprep.subr.mxu0 0.0
  %471 = vmatpush1.msra.mxu0 0.0
  %472 = vmatprep.subr.mxu0 0.0
  %473 = vmatpush1.msra.mxu0 0.0
  %474 = vmatprep.subr.mxu0 0.0
  %475 = vmatpush1.msra.mxu0 0.0
  %476 = vmatprep.subr.mxu0 0.0
  %477 = vmatpush1.msra.mxu0 0.0
  %478 = vmatprep.subr.mxu0 0.0
  %479 = vmatpush1.msra.mxu0 0.0
  %480 = vmatprep.mubr.f32.mxu0 0.0
  %481 = vmatmul.mubr.f32.gmra.mrb[0].mxu0 %v223
  %v482 = vpop.f32.mrb[0].mxu0
  %v483 = vadd.f32 %v391, %v482
  %v484 = vpop.f32.mrb[0].mxu0
  %485 = vdwg.mxu0
  %v486 = vld [vmem:[%s6] sm:$0x1]
  %v488 = vlaneseq
  %v489 = vshrl.u32 %v488, 7
  %v490 = vsub.s32 0, %v489
  %v491 = vrot.slane %v486, %v490
  %v493 = vadd.f32 %v483, %v491
  %v494 = vtanh.pop %v493
  %v495 = vmul.f32 %v494, %v49
  %v496 = vadd.f32 %v495, %v50
  %v497 = vmul.f32 %v496, 0.0
  %499 = vrot.lane.b32.xlu0 %v496, 64
  %v500 = vpop.permute.xlu0 %499
  %v502 = vmul.f32 %v496, %v500
  %504 = vrot.lane.b32.xlu0 %v502, 32
  %v505 = vpop.permute.xlu0 %504
  %v507 = vadd.f32 %v497, %v505
  %v508 = vtanh.pop %v507
  %510 = vrot.lane.b32.xlu0 %v508, 64
  %v511 = vpop.permute.xlu0 %510
  %v513 = vmul.f32 %v496, %v511
  %515 = vrot.lane.b32.xlu0 %v415, 32
  %v516 = vpop.permute.xlu0 %515
  %v517 = vsel %vm221, %v516, 0
  %519 = vmatprep.subr.mxu0 %v210
  %520 = vmatpush1.msra.mxu0 %v209
  %521 = vmatprep.subr.mxu0 %v212
  %522 = vmatpush1.msra.mxu0 %v211
  %523 = vmatprep.subr.mxu0 %v214
  %524 = vmatpush1.msra.mxu0 %v213
  %525 = vmatprep.subr.mxu0 %v216
  %526 = vmatpush1.msra.mxu0 %v215
  %527 = vmatprep.subr.mxu0 0.0
  %528 = vmatpush1.msra.mxu0 0.0
  %529 = vmatprep.subr.mxu0 0.0
  %530 = vmatpush1.msra.mxu0 0.0
  %531 = vmatprep.subr.mxu0 0.0
  %532 = vmatpush1.msra.mxu0 0.0
  %533 = vmatprep.subr.mxu0 0.0
  %534 = vmatpush1.msra.mxu0 0.0
  %535 = vmatprep.subr.mxu0 0.0
  %536 = vmatpush1.msra.mxu0 0.0
  %537 = vmatprep.subr.mxu0 0.0
  %538 = vmatpush1.msra.mxu0 0.0
  %539 = vmatprep.subr.mxu0 0.0
  %540 = vmatpush1.msra.mxu0 0.0
  %541 = vmatprep.subr.mxu0 0.0
  %542 = vmatpush1.msra.mxu0 0.0
  %543 = vmatprep.subr.mxu0 0.0
  %544 = vmatpush1.msra.mxu0 0.0
  %545 = vmatprep.subr.mxu0 0.0
  %546 = vmatpush1.msra.mxu0 0.0
  %547 = vmatprep.subr.mxu0 0.0
  %548 = vmatpush1.msra.mxu0 0.0
  %549 = vmatprep.subr.mxu0 0.0
  %550 = vmatpush1.msra.mxu0 0.0
  %551 = vmatprep.subr.mxu0 0.0
  %552 = vmatpush1.msra.mxu0 0.0
  %553 = vmatprep.subr.mxu0 0.0
  %554 = vmatpush1.msra.mxu0 0.0
  %555 = vmatprep.subr.mxu0 0.0
  %556 = vmatpush1.msra.mxu0 0.0
  %557 = vmatprep.subr.mxu0 0.0
  %558 = vmatpush1.msra.mxu0 0.0
  %559 = vmatprep.subr.mxu0 0.0
  %560 = vmatpush1.msra.mxu0 0.0
  %561 = vmatprep.subr.mxu0 0.0
  %562 = vmatpush1.msra.mxu0 0.0
  %563 = vmatprep.subr.mxu0 0.0
  %564 = vmatpush1.msra.mxu0 0.0
  %565 = vmatprep.subr.mxu0 0.0
  %566 = vmatpush1.msra.mxu0 0.0
  %567 = vmatprep.subr.mxu0 0.0
  %568 = vmatpush1.msra.mxu0 0.0
  %569 = vmatprep.subr.mxu0 0.0
  %570 = vmatpush1.msra.mxu0 0.0
  %571 = vmatprep.subr.mxu0 0.0
  %572 = vmatpush1.msra.mxu0 0.0
  %573 = vmatprep.subr.mxu0 0.0
  %574 = vmatpush1.msra.mxu0 0.0
  %575 = vmatprep.subr.mxu0 0.0
  %576 = vmatpush1.msra.mxu0 0.0
  %577 = vmatprep.subr.mxu0 0.0
  %578 = vmatpush1.msra.mxu0 0.0
  %579 = vmatprep.subr.mxu0 0.0
  %580 = vmatpush1.msra.mxu0 0.0
  %581 = vmatprep.subr.mxu0 0.0
  %582 = vmatpush1.msra.mxu0 0.0
  %583 = vmatprep.mubr.f32.mxu0 0.0
  %584 = vmatmul.mubr.f32.gmra.mrb[0].mxu0 %v517
  %v585 = vpop.f32.mrb[0].mxu0
  %v586 = vadd.f32 0.0, %v585
  %v587 = vpop.f32.mrb[0].mxu0
  %v588 = vadd.f32 0.0, %v587
  %589 = vdwg.mxu0
  %s590 = scalar_lea.vmem [#allocation2], 16
  %v591 = vld [vmem:[%s590] sm:$0xff]
  %v592 = vadd.f32 %v586, %v591
  %v593 = vtanh.pop %v592
  %v594 = vmul.f32 %v593, %v49
  %v595 = vadd.f32 %v594, %v50
  %v596 = vmul.f32 %v595, %v409
  %598 = vrot.lane.b32.xlu0 %v595, 64
  %v599 = vpop.permute.xlu0 %598
  %v601 = vmul.f32 %v595, %v599
  %603 = vrot.lane.b32.xlu0 %v601, 32
  %v604 = vpop.permute.xlu0 %603
  %v606 = vadd.f32 %v596, %v604
  %v607 = vtanh.pop %v606
  %609 = vrot.lane.b32.xlu0 %v607, 64
  %v610 = vpop.permute.xlu0 %609
  %v612 = vmul.f32 %v595, %v610
  %614 = vrot.lane.b32.xlu0 %v513, 32
  %v615 = vpop.permute.xlu0 %614
  %v616 = vsel %vm221, %v615, 0
  %618 = vmatprep.subr.mxu0 0.0
  %619 = vmatpush1.msra.mxu0 %v217
  %620 = vmatprep.subr.mxu0 0.0
  %621 = vmatpush1.msra.mxu0 %v218
  %622 = vmatprep.subr.mxu0 0.0
  %623 = vmatpush1.msra.mxu0 %v219
  %624 = vmatprep.subr.mxu0 0.0
  %625 = vmatpush1.msra.mxu0 %v220
  %626 = vmatprep.subr.mxu0 0.0
  %627 = vmatpush1.msra.mxu0 0.0
  %628 = vmatprep.subr.mxu0 0.0
  %629 = vmatpush1.msra.mxu0 0.0
  %630 = vmatprep.subr.mxu0 0.0
  %631 = vmatpush1.msra.mxu0 0.0
  %632 = vmatprep.subr.mxu0 0.0
  %633 = vmatpush1.msra.mxu0 0.0
  %634 = vmatprep.subr.mxu0 0.0
  %635 = vmatpush1.msra.mxu0 0.0
  %636 = vmatprep.subr.mxu0 0.0
  %637 = vmatpush1.msra.mxu0 0.0
  %638 = vmatprep.subr.mxu0 0.0
  %639 = vmatpush1.msra.mxu0 0.0
  %640 = vmatprep.subr.mxu0 0.0
  %641 = vmatpush1.msra.mxu0 0.0
  %642 = vmatprep.subr.mxu0 0.0
  %643 = vmatpush1.msra.mxu0 0.0
  %644 = vmatprep.subr.mxu0 0.0
  %645 = vmatpush1.msra.mxu0 0.0
  %646 = vmatprep.subr.mxu0 0.0
  %647 = vmatpush1.msra.mxu0 0.0
  %648 = vmatprep.subr.mxu0 0.0
  %649 = vmatpush1.msra.mxu0 0.0
  %650 = vmatprep.subr.mxu0 0.0
  %651 = vmatpush1.msra.mxu0 0.0
  %652 = vmatprep.subr.mxu0 0.0
  %653 = vmatpush1.msra.mxu0 0.0
  %654 = vmatprep.subr.mxu0 0.0
  %655 = vmatpush1.msra.mxu0 0.0
  %656 = vmatprep.subr.mxu0 0.0
  %657 = vmatpush1.msra.mxu0 0.0
  %658 = vmatprep.subr.mxu0 0.0
  %659 = vmatpush1.msra.mxu0 0.0
  %660 = vmatprep.subr.mxu0 0.0
  %661 = vmatpush1.msra.mxu0 0.0
  %662 = vmatprep.subr.mxu0 0.0
  %663 = vmatpush1.msra.mxu0 0.0
  %664 = vmatprep.subr.mxu0 0.0
  %665 = vmatpush1.msra.mxu0 0.0
  %666 = vmatprep.subr.mxu0 0.0
  %667 = vmatpush1.msra.mxu0 0.0
  %668 = vmatprep.subr.mxu0 0.0
  %669 = vmatpush1.msra.mxu0 0.0
  %670 = vmatprep.subr.mxu0 0.0
  %671 = vmatpush1.msra.mxu0 0.0
  %672 = vmatprep.subr.mxu0 0.0
  %673 = vmatpush1.msra.mxu0 0.0
  %674 = vmatprep.subr.mxu0 0.0
  %675 = vmatpush1.msra.mxu0 0.0
  %676 = vmatprep.subr.mxu0 0.0
  %677 = vmatpush1.msra.mxu0 0.0
  %678 = vmatprep.subr.mxu0 0.0
  %679 = vmatpush1.msra.mxu0 0.0
  %680 = vmatprep.subr.mxu0 0.0
  %681 = vmatpush1.msra.mxu0 0.0
  %682 = vmatprep.mubr.f32.mxu0 0.0
  %683 = vmatmul.mubr.f32.gmra.mrb[0].mxu0 %v616
  %v684 = vpop.f32.mrb[0].mxu0
  %v685 = vadd.f32 %v588, %v684
  %v686 = vpop.f32.mrb[0].mxu0
  %687 = vdwg.mxu0
  %v688 = vadd.f32 %v685, %v491
  %v689 = vtanh.pop %v688
  %v690 = vmul.f32 %v689, %v49
  %v691 = vadd.f32 %v690, %v50
  %v692 = vmul.f32 %v691, %v507
  %694 = vrot.lane.b32.xlu0 %v691, 64
  %v695 = vpop.permute.xlu0 %694
  %v697 = vmul.f32 %v691, %v695
  %699 = vrot.lane.b32.xlu0 %v697, 32
  %v700 = vpop.permute.xlu0 %699
  %v702 = vadd.f32 %v692, %v700
  %v703 = vtanh.pop %v702
  %705 = vrot.lane.b32.xlu0 %v703, 64
  %v706 = vpop.permute.xlu0 %705
  %v708 = vmul.f32 %v691, %v706
  %710 = vrot.lane.b32.xlu0 %v612, 32
  %v711 = vpop.permute.xlu0 %710
  %v712 = vsel %vm221, %v711, 0
  %714 = vmatprep.subr.mxu0 %v210
  %715 = vmatpush1.msra.mxu0 %v209
  %716 = vmatprep.subr.mxu0 %v212
  %717 = vmatpush1.msra.mxu0 %v211
  %718 = vmatprep.subr.mxu0 %v214
  %719 = vmatpush1.msra.mxu0 %v213
  %720 = vmatprep.subr.mxu0 %v216
  %721 = vmatpush1.msra.mxu0 %v215
  %722 = vmatprep.subr.mxu0 0.0
  %723 = vmatpush1.msra.mxu0 0.0
  %724 = vmatprep.subr.mxu0 0.0
  %725 = vmatpush1.msra.mxu0 0.0
  %726 = vmatprep.subr.mxu0 0.0
  %727 = vmatpush1.msra.mxu0 0.0
  %728 = vmatprep.subr.mxu0 0.0
  %729 = vmatpush1.msra.mxu0 0.0
  %730 = vmatprep.subr.mxu0 0.0
  %731 = vmatpush1.msra.mxu0 0.0
  %732 = vmatprep.subr.mxu0 0.0
  %733 = vmatpush1.msra.mxu0 0.0
  %734 = vmatprep.subr.mxu0 0.0
  %735 = vmatpush1.msra.mxu0 0.0
  %736 = vmatprep.subr.mxu0 0.0
  %737 = vmatpush1.msra.mxu0 0.0
  %738 = vmatprep.subr.mxu0 0.0
  %739 = vmatpush1.msra.mxu0 0.0
  %740 = vmatprep.subr.mxu0 0.0
  %741 = vmatpush1.msra.mxu0 0.0
  %742 = vmatprep.subr.mxu0 0.0
  %743 = vmatpush1.msra.mxu0 0.0
  %744 = vmatprep.subr.mxu0 0.0
  %745 = vmatpush1.msra.mxu0 0.0
  %746 = vmatprep.subr.mxu0 0.0
  %747 = vmatpush1.msra.mxu0 0.0
  %748 = vmatprep.subr.mxu0 0.0
  %749 = vmatpush1.msra.mxu0 0.0
  %750 = vmatprep.subr.mxu0 0.0
  %751 = vmatpush1.msra.mxu0 0.0
  %752 = vmatprep.subr.mxu0 0.0
  %753 = vmatpush1.msra.mxu0 0.0
  %754 = vmatprep.subr.mxu0 0.0
  %755 = vmatpush1.msra.mxu0 0.0
  %756 = vmatprep.subr.mxu0 0.0
  %757 = vmatpush1.msra.mxu0 0.0
  %758 = vmatprep.subr.mxu0 0.0
  %759 = vmatpush1.msra.mxu0 0.0
  %760 = vmatprep.subr.mxu0 0.0
  %761 = vmatpush1.msra.mxu0 0.0
  %762 = vmatprep.subr.mxu0 0.0
  %763 = vmatpush1.msra.mxu0 0.0
  %764 = vmatprep.subr.mxu0 0.0
  %765 = vmatpush1.msra.mxu0 0.0
  %766 = vmatprep.subr.mxu0 0.0
  %767 = vmatpush1.msra.mxu0 0.0
  %768 = vmatprep.subr.mxu0 0.0
  %769 = vmatpush1.msra.mxu0 0.0
  %770 = vmatprep.subr.mxu0 0.0
  %771 = vmatpush1.msra.mxu0 0.0
  %772 = vmatprep.subr.mxu0 0.0
  %773 = vmatpush1.msra.mxu0 0.0
  %774 = vmatprep.subr.mxu0 0.0
  %775 = vmatpush1.msra.mxu0 0.0
  %776 = vmatprep.subr.mxu0 0.0
  %777 = vmatpush1.msra.mxu0 0.0
  %778 = vmatprep.mubr.f32.mxu0 0.0
  %779 = vmatmul.mubr.f32.gmra.mrb[0].mxu0 %v712
  %v780 = vpop.f32.mrb[0].mxu0
  %v781 = vadd.f32 0.0, %v780
  %v782 = vpop.f32.mrb[0].mxu0
  %v783 = vadd.f32 0.0, %v782
  %784 = vdwg.mxu0
  %s785 = scalar_lea.vmem [#allocation2], 24
  %v786 = vld [vmem:[%s785] sm:$0xff]
  %v787 = vadd.f32 %v781, %v786
  %v788 = vtanh.pop %v787
  %v789 = vmul.f32 %v788, %v49
  %v790 = vadd.f32 %v789, %v50
  %v791 = vmul.f32 %v790, %v606
  %793 = vrot.lane.b32.xlu0 %v790, 64
  %v794 = vpop.permute.xlu0 %793
  %v796 = vmul.f32 %v790, %v794
  %798 = vrot.lane.b32.xlu0 %v796, 32
  %v799 = vpop.permute.xlu0 %798
  %v801 = vadd.f32 %v791, %v799
  %v802 = vtanh.pop %v801
  %804 = vrot.lane.b32.xlu0 %v802, 64
  %v805 = vpop.permute.xlu0 %804
  %v807 = vmul.f32 %v790, %v805
  %809 = vrot.lane.b32.xlu0 %v708, 32
  %v810 = vpop.permute.xlu0 %809
  %v811 = vsel %vm221, %v810, 0
  %813 = vmatprep.subr.mxu0 0.0
  %814 = vmatpush1.msra.mxu0 %v217
  %815 = vmatprep.subr.mxu0 0.0
  %816 = vmatpush1.msra.mxu0 %v218
  %817 = vmatprep.subr.mxu0 0.0
  %818 = vmatpush1.msra.mxu0 %v219
  %819 = vmatprep.subr.mxu0 0.0
  %820 = vmatpush1.msra.mxu0 %v220
  %821 = vmatprep.subr.mxu0 0.0
  %822 = vmatpush1.msra.mxu0 0.0
  %823 = vmatprep.subr.mxu0 0.0
  %824 = vmatpush1.msra.mxu0 0.0
  %825 = vmatprep.subr.mxu0 0.0
  %826 = vmatpush1.msra.mxu0 0.0
  %827 = vmatprep.subr.mxu0 0.0
  %828 = vmatpush1.msra.mxu0 0.0
  %829 = vmatprep.subr.mxu0 0.0
  %830 = vmatpush1.msra.mxu0 0.0
  %831 = vmatprep.subr.mxu0 0.0
  %832 = vmatpush1.msra.mxu0 0.0
  %833 = vmatprep.subr.mxu0 0.0
  %834 = vmatpush1.msra.mxu0 0.0
  %835 = vmatprep.subr.mxu0 0.0
  %836 = vmatpush1.msra.mxu0 0.0
  %837 = vmatprep.subr.mxu0 0.0
  %838 = vmatpush1.msra.mxu0 0.0
  %839 = vmatprep.subr.mxu0 0.0
  %840 = vmatpush1.msra.mxu0 0.0
  %841 = vmatprep.subr.mxu0 0.0
  %842 = vmatpush1.msra.mxu0 0.0
  %843 = vmatprep.subr.mxu0 0.0
  %844 = vmatpush1.msra.mxu0 0.0
  %845 = vmatprep.subr.mxu0 0.0
  %846 = vmatpush1.msra.mxu0 0.0
  %847 = vmatprep.subr.mxu0 0.0
  %848 = vmatpush1.msra.mxu0 0.0
  %849 = vmatprep.subr.mxu0 0.0
  %850 = vmatpush1.msra.mxu0 0.0
  %851 = vmatprep.subr.mxu0 0.0
  %852 = vmatpush1.msra.mxu0 0.0
  %853 = vmatprep.subr.mxu0 0.0
  %854 = vmatpush1.msra.mxu0 0.0
  %855 = vmatprep.subr.mxu0 0.0
  %856 = vmatpush1.msra.mxu0 0.0
  %857 = vmatprep.subr.mxu0 0.0
  %858 = vmatpush1.msra.mxu0 0.0
  %859 = vmatprep.subr.mxu0 0.0
  %860 = vmatpush1.msra.mxu0 0.0
  %861 = vmatprep.subr.mxu0 0.0
  %862 = vmatpush1.msra.mxu0 0.0
  %863 = vmatprep.subr.mxu0 0.0
  %864 = vmatpush1.msra.mxu0 0.0
  %865 = vmatprep.subr.mxu0 0.0
  %866 = vmatpush1.msra.mxu0 0.0
  %867 = vmatprep.subr.mxu0 0.0
  %868 = vmatpush1.msra.mxu0 0.0
  %869 = vmatprep.subr.mxu0 0.0
  %870 = vmatpush1.msra.mxu0 0.0
  %871 = vmatprep.subr.mxu0 0.0
  %872 = vmatpush1.msra.mxu0 0.0
  %873 = vmatprep.subr.mxu0 0.0
  %874 = vmatpush1.msra.mxu0 0.0
  %875 = vmatprep.subr.mxu0 0.0
  %876 = vmatpush1.msra.mxu0 0.0
  %877 = vmatprep.mubr.f32.mxu0 0.0
  %878 = vmatmul.mubr.f32.gmra.mrb[0].mxu0 %v811
  %v879 = vpop.f32.mrb[0].mxu0
  %v880 = vadd.f32 %v783, %v879
  %v881 = vpop.f32.mrb[0].mxu0
  %882 = vdwg.mxu0
  %v883 = vadd.f32 %v880, %v491
  %v884 = vtanh.pop %v883
  %v885 = vmul.f32 %v884, %v49
  %v886 = vadd.f32 %v885, %v50
  %v887 = vmul.f32 %v886, %v702
  %889 = vrot.lane.b32.xlu0 %v886, 64
  %v890 = vpop.permute.xlu0 %889
  %v892 = vmul.f32 %v886, %v890
  %894 = vrot.lane.b32.xlu0 %v892, 32
  %v895 = vpop.permute.xlu0 %894
  %v897 = vadd.f32 %v887, %v895
  %v898 = vtanh.pop %v897
  %900 = vrot.lane.b32.xlu0 %v898, 64
  %v901 = vpop.permute.xlu0 %900
  %v903 = vmul.f32 %v886, %v901
  %905 = vrot.lane.b32.xlu0 %v807, 32
  %v906 = vpop.permute.xlu0 %905
  %v907 = vsel %vm221, %v906, 0
  %909 = vmatprep.subr.mxu0 %v210
  %910 = vmatpush1.msra.mxu0 %v209
  %911 = vmatprep.subr.mxu0 %v212
  %912 = vmatpush1.msra.mxu0 %v211
  %913 = vmatprep.subr.mxu0 %v214
  %914 = vmatpush1.msra.mxu0 %v213
  %915 = vmatprep.subr.mxu0 %v216
  %916 = vmatpush1.msra.mxu0 %v215
  %917 = vmatprep.subr.mxu0 0.0
  %918 = vmatpush1.msra.mxu0 0.0
  %919 = vmatprep.subr.mxu0 0.0
  %920 = vmatpush1.msra.mxu0 0.0
  %921 = vmatprep.subr.mxu0 0.0
  %922 = vmatpush1.msra.mxu0 0.0
  %923 = vmatprep.subr.mxu0 0.0
  %924 = vmatpush1.msra.mxu0 0.0
  %925 = vmatprep.subr.mxu0 0.0
  %926 = vmatpush1.msra.mxu0 0.0
  %927 = vmatprep.subr.mxu0 0.0
  %928 = vmatpush1.msra.mxu0 0.0
  %929 = vmatprep.subr.mxu0 0.0
  %930 = vmatpush1.msra.mxu0 0.0
  %931 = vmatprep.subr.mxu0 0.0
  %932 = vmatpush1.msra.mxu0 0.0
  %933 = vmatprep.subr.mxu0 0.0
  %934 = vmatpush1.msra.mxu0 0.0
  %935 = vmatprep.subr.mxu0 0.0
  %936 = vmatpush1.msra.mxu0 0.0
  %937 = vmatprep.subr.mxu0 0.0
  %938 = vmatpush1.msra.mxu0 0.0
  %939 = vmatprep.subr.mxu0 0.0
  %940 = vmatpush1.msra.mxu0 0.0
  %941 = vmatprep.subr.mxu0 0.0
  %942 = vmatpush1.msra.mxu0 0.0
  %943 = vmatprep.subr.mxu0 0.0
  %944 = vmatpush1.msra.mxu0 0.0
  %945 = vmatprep.subr.mxu0 0.0
  %946 = vmatpush1.msra.mxu0 0.0
  %947 = vmatprep.subr.mxu0 0.0
  %948 = vmatpush1.msra.mxu0 0.0
  %949 = vmatprep.subr.mxu0 0.0
  %950 = vmatpush1.msra.mxu0 0.0
  %951 = vmatprep.subr.mxu0 0.0
  %952 = vmatpush1.msra.mxu0 0.0
  %953 = vmatprep.subr.mxu0 0.0
  %954 = vmatpush1.msra.mxu0 0.0
  %955 = vmatprep.subr.mxu0 0.0
  %956 = vmatpush1.msra.mxu0 0.0
  %957 = vmatprep.subr.mxu0 0.0
  %958 = vmatpush1.msra.mxu0 0.0
  %959 = vmatprep.subr.mxu0 0.0
  %960 = vmatpush1.msra.mxu0 0.0
  %961 = vmatprep.subr.mxu0 0.0
  %962 = vmatpush1.msra.mxu0 0.0
  %963 = vmatprep.subr.mxu0 0.0
  %964 = vmatpush1.msra.mxu0 0.0
  %965 = vmatprep.subr.mxu0 0.0
  %966 = vmatpush1.msra.mxu0 0.0
  %967 = vmatprep.subr.mxu0 0.0
  %968 = vmatpush1.msra.mxu0 0.0
  %969 = vmatprep.subr.mxu0 0.0
  %970 = vmatpush1.msra.mxu0 0.0
  %971 = vmatprep.subr.mxu0 0.0
  %972 = vmatpush1.msra.mxu0 0.0
  %973 = vmatprep.mubr.f32.mxu0 0.0
  %974 = vmatmul.mubr.f32.gmra.mrb[0].mxu0 %v907
  %v975 = vpop.f32.mrb[0].mxu0
  %v976 = vadd.f32 0.0, %v975
  %v977 = vpop.f32.mrb[0].mxu0
  %v978 = vadd.f32 0.0, %v977
  %979 = vdwg.mxu0
  %s980 = scalar_lea.vmem [#allocation2], 32
  %v981 = vld [vmem:[%s980] sm:$0xff]
  %v982 = vadd.f32 %v976, %v981
  %v983 = vtanh.pop %v982
  %v984 = vmul.f32 %v983, %v49
  %v985 = vadd.f32 %v984, %v50
  %v986 = vmul.f32 %v985, %v801
  %988 = vrot.lane.b32.xlu0 %v985, 64
  %v989 = vpop.permute.xlu0 %988
  %v991 = vmul.f32 %v985, %v989
  %993 = vrot.lane.b32.xlu0 %v991, 32
  %v994 = vpop.permute.xlu0 %993
  %v996 = vadd.f32 %v986, %v994
  %v997 = vtanh.pop %v996
  %999 = vrot.lane.b32.xlu0 %v997, 64
  %v1000 = vpop.permute.xlu0 %999
  %v1002 = vmul.f32 %v985, %v1000
  %1004 = vrot.lane.b32.xlu0 %v903, 32
  %v1005 = vpop.permute.xlu0 %1004
  %v1006 = vsel %vm221, %v1005, 0
  %1008 = vmatprep.subr.mxu0 0.0
  %1009 = vmatpush1.msra.mxu0 %v217
  %1010 = vmatprep.subr.mxu0 0.0
  %1011 = vmatpush1.msra.mxu0 %v218
  %1012 = vmatprep.subr.mxu0 0.0
  %1013 = vmatpush1.msra.mxu0 %v219
  %1014 = vmatprep.subr.mxu0 0.0
  %1015 = vmatpush1.msra.mxu0 %v220
  %1016 = vmatprep.subr.mxu0 0.0
  %1017 = vmatpush1.msra.mxu0 0.0
  %1018 = vmatprep.subr.mxu0 0.0
  %1019 = vmatpush1.msra.mxu0 0.0
  %1020 = vmatprep.subr.mxu0 0.0
  %1021 = vmatpush1.msra.mxu0 0.0
  %1022 = vmatprep.subr.mxu0 0.0
  %1023 = vmatpush1.msra.mxu0 0.0
  %1024 = vmatprep.subr.mxu0 0.0
  %1025 = vmatpush1.msra.mxu0 0.0
  %1026 = vmatprep.subr.mxu0 0.0
  %1027 = vmatpush1.msra.mxu0 0.0
  %1028 = vmatprep.subr.mxu0 0.0
  %1029 = vmatpush1.msra.mxu0 0.0
  %1030 = vmatprep.subr.mxu0 0.0
  %1031 = vmatpush1.msra.mxu0 0.0
  %1032 = vmatprep.subr.mxu0 0.0
  %1033 = vmatpush1.msra.mxu0 0.0
  %1034 = vmatprep.subr.mxu0 0.0
  %1035 = vmatpush1.msra.mxu0 0.0
  %1036 = vmatprep.subr.mxu0 0.0
  %1037 = vmatpush1.msra.mxu0 0.0
  %1038 = vmatprep.subr.mxu0 0.0
  %1039 = vmatpush1.msra.mxu0 0.0
  %1040 = vmatprep.subr.mxu0 0.0
  %1041 = vmatpush1.msra.mxu0 0.0
  %1042 = vmatprep.subr.mxu0 0.0
  %1043 = vmatpush1.msra.mxu0 0.0
  %1044 = vmatprep.subr.mxu0 0.0
  %1045 = vmatpush1.msra.mxu0 0.0
  %1046 = vmatprep.subr.mxu0 0.0
  %1047 = vmatpush1.msra.mxu0 0.0
  %1048 = vmatprep.subr.mxu0 0.0
  %1049 = vmatpush1.msra.mxu0 0.0
  %1050 = vmatprep.subr.mxu0 0.0
  %1051 = vmatpush1.msra.mxu0 0.0
  %1052 = vmatprep.subr.mxu0 0.0
  %1053 = vmatpush1.msra.mxu0 0.0
  %1054 = vmatprep.subr.mxu0 0.0
  %1055 = vmatpush1.msra.mxu0 0.0
  %1056 = vmatprep.subr.mxu0 0.0
  %1057 = vmatpush1.msra.mxu0 0.0
  %1058 = vmatprep.subr.mxu0 0.0
  %1059 = vmatpush1.msra.mxu0 0.0
  %1060 = vmatprep.subr.mxu0 0.0
  %1061 = vmatpush1.msra.mxu0 0.0
  %1062 = vmatprep.subr.mxu0 0.0
  %1063 = vmatpush1.msra.mxu0 0.0
  %1064 = vmatprep.subr.mxu0 0.0
  %1065 = vmatpush1.msra.mxu0 0.0
  %1066 = vmatprep.subr.mxu0 0.0
  %1067 = vmatpush1.msra.mxu0 0.0
  %1068 = vmatprep.subr.mxu0 0.0
  %1069 = vmatpush1.msra.mxu0 0.0
  %1070 = vmatprep.subr.mxu0 0.0
  %1071 = vmatpush1.msra.mxu0 0.0
  %1072 = vmatprep.mubr.f32.mxu0 0.0
  %1073 = vmatmul.mubr.f32.gmra.mrb[0].mxu0 %v1006
  %v1074 = vpop.f32.mrb[0].mxu0
  %v1075 = vadd.f32 %v978, %v1074
  %v1076 = vpop.f32.mrb[0].mxu0
  %1077 = vdwg.mxu0
  %v1078 = vadd.f32 %v1075, %v491
  %v1079 = vtanh.pop %v1078
  %v1080 = vmul.f32 %v1079, %v49
  %v1081 = vadd.f32 %v1080, %v50
  %v1082 = vmul.f32 %v1081, %v897
  %1084 = vrot.lane.b32.xlu0 %v1081, 64
  %v1085 = vpop.permute.xlu0 %1084
  %v1087 = vmul.f32 %v1081, %v1085
  %1089 = vrot.lane.b32.xlu0 %v1087, 32
  %v1090 = vpop.permute.xlu0 %1089
  %v1092 = vadd.f32 %v1082, %v1090
  %v1093 = vtanh.pop %v1092
  %1095 = vrot.lane.b32.xlu0 %v1093, 64
  %v1096 = vpop.permute.xlu0 %1095
  %v1098 = vmul.f32 %v1081, %v1096
  %1100 = vrot.lane.b32.xlu0 %v1002, 32
  %v1101 = vpop.permute.xlu0 %1100
  %v1102 = vsel %vm221, %v1101, 0
  %1104 = vmatprep.subr.mxu0 %v210
  %1105 = vmatpush1.msra.mxu0 %v209
  %1106 = vmatprep.subr.mxu0 %v212
  %1107 = vmatpush1.msra.mxu0 %v211
  %1108 = vmatprep.subr.mxu0 %v214
  %1109 = vmatpush1.msra.mxu0 %v213
  %1110 = vmatprep.subr.mxu0 %v216
  %1111 = vmatpush1.msra.mxu0 %v215
  %1112 = vmatprep.subr.mxu0 0.0
  %1113 = vmatpush1.msra.mxu0 0.0
  %1114 = vmatprep.subr.mxu0 0.0
  %1115 = vmatpush1.msra.mxu0 0.0
  %1116 = vmatprep.subr.mxu0 0.0
  %1117 = vmatpush1.msra.mxu0 0.0
  %1118 = vmatprep.subr.mxu0 0.0
  %1119 = vmatpush1.msra.mxu0 0.0
  %1120 = vmatprep.subr.mxu0 0.0
  %1121 = vmatpush1.msra.mxu0 0.0
  %1122 = vmatprep.subr.mxu0 0.0
  %1123 = vmatpush1.msra.mxu0 0.0
  %1124 = vmatprep.subr.mxu0 0.0
  %1125 = vmatpush1.msra.mxu0 0.0
  %1126 = vmatprep.subr.mxu0 0.0
  %1127 = vmatpush1.msra.mxu0 0.0
  %1128 = vmatprep.subr.mxu0 0.0
  %1129 = vmatpush1.msra.mxu0 0.0
  %1130 = vmatprep.subr.mxu0 0.0
  %1131 = vmatpush1.msra.mxu0 0.0
  %1132 = vmatprep.subr.mxu0 0.0
  %1133 = vmatpush1.msra.mxu0 0.0
  %1134 = vmatprep.subr.mxu0 0.0
  %1135 = vmatpush1.msra.mxu0 0.0
  %1136 = vmatprep.subr.mxu0 0.0
  %1137 = vmatpush1.msra.mxu0 0.0
  %1138 = vmatprep.subr.mxu0 0.0
  %1139 = vmatpush1.msra.mxu0 0.0
  %1140 = vmatprep.subr.mxu0 0.0
  %1141 = vmatpush1.msra.mxu0 0.0
  %1142 = vmatprep.subr.mxu0 0.0
  %1143 = vmatpush1.msra.mxu0 0.0
  %1144 = vmatprep.subr.mxu0 0.0
  %1145 = vmatpush1.msra.mxu0 0.0
  %1146 = vmatprep.subr.mxu0 0.0
  %1147 = vmatpush1.msra.mxu0 0.0
  %1148 = vmatprep.subr.mxu0 0.0
  %1149 = vmatpush1.msra.mxu0 0.0
  %1150 = vmatprep.subr.mxu0 0.0
  %1151 = vmatpush1.msra.mxu0 0.0
  %1152 = vmatprep.subr.mxu0 0.0
  %1153 = vmatpush1.msra.mxu0 0.0
  %1154 = vmatprep.subr.mxu0 0.0
  %1155 = vmatpush1.msra.mxu0 0.0
  %1156 = vmatprep.subr.mxu0 0.0
  %1157 = vmatpush1.msra.mxu0 0.0
  %1158 = vmatprep.subr.mxu0 0.0
  %1159 = vmatpush1.msra.mxu0 0.0
  %1160 = vmatprep.subr.mxu0 0.0
  %1161 = vmatpush1.msra.mxu0 0.0
  %1162 = vmatprep.subr.mxu0 0.0
  %1163 = vmatpush1.msra.mxu0 0.0
  %1164 = vmatprep.subr.mxu0 0.0
  %1165 = vmatpush1.msra.mxu0 0.0
  %1166 = vmatprep.subr.mxu0 0.0
  %1167 = vmatpush1.msra.mxu0 0.0
  %1168 = vmatprep.mubr.f32.mxu0 0.0
  %1169 = vmatmul.mubr.f32.gmra.mrb[0].mxu0 %v1102
  %v1170 = vpop.f32.mrb[0].mxu0
  %v1171 = vadd.f32 0.0, %v1170
  %v1172 = vpop.f32.mrb[0].mxu0
  %v1173 = vadd.f32 0.0, %v1172
  %1174 = vdwg.mxu0
  %s1175 = scalar_lea.vmem [#allocation2], 40
  %v1176 = vld [vmem:[%s1175] sm:$0xff]
  %v1177 = vadd.f32 %v1171, %v1176
  %v1178 = vtanh.pop %v1177
  %v1179 = vmul.f32 %v1178, %v49
  %v1180 = vadd.f32 %v1179, %v50
  %v1181 = vmul.f32 %v1180, %v996
  %1183 = vrot.lane.b32.xlu0 %v1180, 64
  %v1184 = vpop.permute.xlu0 %1183
  %v1186 = vmul.f32 %v1180, %v1184
  %1188 = vrot.lane.b32.xlu0 %v1186, 32
  %v1189 = vpop.permute.xlu0 %1188
  %v1191 = vadd.f32 %v1181, %v1189
  %v1192 = vtanh.pop %v1191
  %1194 = vrot.lane.b32.xlu0 %v1192, 64
  %v1195 = vpop.permute.xlu0 %1194
  %v1197 = vmul.f32 %v1180, %v1195
  %1199 = vrot.lane.b32.xlu0 %v1098, 32
  %v1200 = vpop.permute.xlu0 %1199
  %v1201 = vsel %vm221, %v1200, 0
  %1203 = vmatprep.subr.mxu0 0.0
  %1204 = vmatpush1.msra.mxu0 %v217
  %1205 = vmatprep.subr.mxu0 0.0
  %1206 = vmatpush1.msra.mxu0 %v218
  %1207 = vmatprep.subr.mxu0 0.0
  %1208 = vmatpush1.msra.mxu0 %v219
  %1209 = vmatprep.subr.mxu0 0.0
  %1210 = vmatpush1.msra.mxu0 %v220
  %1211 = vmatprep.subr.mxu0 0.0
  %1212 = vmatpush1.msra.mxu0 0.0
  %1213 = vmatprep.subr.mxu0 0.0
  %1214 = vmatpush1.msra.mxu0 0.0
  %1215 = vmatprep.subr.mxu0 0.0
  %1216 = vmatpush1.msra.mxu0 0.0
  %1217 = vmatprep.subr.mxu0 0.0
  %1218 = vmatpush1.msra.mxu0 0.0
  %1219 = vmatprep.subr.mxu0 0.0
  %1220 = vmatpush1.msra.mxu0 0.0
  %1221 = vmatprep.subr.mxu0 0.0
  %1222 = vmatpush1.msra.mxu0 0.0
  %1223 = vmatprep.subr.mxu0 0.0
  %1224 = vmatpush1.msra.mxu0 0.0
  %1225 = vmatprep.subr.mxu0 0.0
  %1226 = vmatpush1.msra.mxu0 0.0
  %1227 = vmatprep.subr.mxu0 0.0
  %1228 = vmatpush1.msra.mxu0 0.0
  %1229 = vmatprep.subr.mxu0 0.0
  %1230 = vmatpush1.msra.mxu0 0.0
  %1231 = vmatprep.subr.mxu0 0.0
  %1232 = vmatpush1.msra.mxu0 0.0
  %1233 = vmatprep.subr.mxu0 0.0
  %1234 = vmatpush1.msra.mxu0 0.0
  %1235 = vmatprep.subr.mxu0 0.0
  %1236 = vmatpush1.msra.mxu0 0.0
  %1237 = vmatprep.subr.mxu0 0.0
  %1238 = vmatpush1.msra.mxu0 0.0
  %1239 = vmatprep.subr.mxu0 0.0
  %1240 = vmatpush1.msra.mxu0 0.0
  %1241 = vmatprep.subr.mxu0 0.0
  %1242 = vmatpush1.msra.mxu0 0.0
  %1243 = vmatprep.subr.mxu0 0.0
  %1244 = vmatpush1.msra.mxu0 0.0
  %1245 = vmatprep.subr.mxu0 0.0
  %1246 = vmatpush1.msra.mxu0 0.0
  %1247 = vmatprep.subr.mxu0 0.0
  %1248 = vmatpush1.msra.mxu0 0.0
  %1249 = vmatprep.subr.mxu0 0.0
  %1250 = vmatpush1.msra.mxu0 0.0
  %1251 = vmatprep.subr.mxu0 0.0
  %1252 = vmatpush1.msra.mxu0 0.0
  %1253 = vmatprep.subr.mxu0 0.0
  %1254 = vmatpush1.msra.mxu0 0.0
  %1255 = vmatprep.subr.mxu0 0.0
  %1256 = vmatpush1.msra.mxu0 0.0
  %1257 = vmatprep.subr.mxu0 0.0
  %1258 = vmatpush1.msra.mxu0 0.0
  %1259 = vmatprep.subr.mxu0 0.0
  %1260 = vmatpush1.msra.mxu0 0.0
  %1261 = vmatprep.subr.mxu0 0.0
  %1262 = vmatpush1.msra.mxu0 0.0
  %1263 = vmatprep.subr.mxu0 0.0
  %1264 = vmatpush1.msra.mxu0 0.0
  %1265 = vmatprep.subr.mxu0 0.0
  %1266 = vmatpush1.msra.mxu0 0.0
  %1267 = vmatprep.mubr.f32.mxu0 0.0
  %1268 = vmatmul.mubr.f32.gmra.mrb[0].mxu0 %v1201
  %v1269 = vpop.f32.mrb[0].mxu0
  %v1270 = vadd.f32 %v1173, %v1269
  %v1271 = vpop.f32.mrb[0].mxu0
  %1272 = vdwg.mxu0
  %v1273 = vadd.f32 %v1270, %v491
  %v1274 = vtanh.pop %v1273
  %v1275 = vmul.f32 %v1274, %v49
  %v1276 = vadd.f32 %v1275, %v50
  %v1277 = vmul.f32 %v1276, %v1092
  %1279 = vrot.lane.b32.xlu0 %v1276, 64
  %v1280 = vpop.permute.xlu0 %1279
  %v1282 = vmul.f32 %v1276, %v1280
  %1284 = vrot.lane.b32.xlu0 %v1282, 32
  %v1285 = vpop.permute.xlu0 %1284
  %v1287 = vadd.f32 %v1277, %v1285
  %v1288 = vtanh.pop %v1287
  %1290 = vrot.lane.b32.xlu0 %v1288, 64
  %v1291 = vpop.permute.xlu0 %1290
  %v1293 = vmul.f32 %v1276, %v1291
  %1295 = vrot.lane.b32.xlu0 %v1197, 32
  %v1296 = vpop.permute.xlu0 %1295
  %v1297 = vsel %vm221, %v1296, 0
  %1299 = vmatprep.subr.mxu0 %v210
  %1300 = vmatpush1.msra.mxu0 %v209
  %1301 = vmatprep.subr.mxu0 %v212
  %1302 = vmatpush1.msra.mxu0 %v211
  %1303 = vmatprep.subr.mxu0 %v214
  %1304 = vmatpush1.msra.mxu0 %v213
  %1305 = vmatprep.subr.mxu0 %v216
  %1306 = vmatpush1.msra.mxu0 %v215
  %1307 = vmatprep.subr.mxu0 0.0
  %1308 = vmatpush1.msra.mxu0 0.0
  %1309 = vmatprep.subr.mxu0 0.0
  %1310 = vmatpush1.msra.mxu0 0.0
  %1311 = vmatprep.subr.mxu0 0.0
  %1312 = vmatpush1.msra.mxu0 0.0
  %1313 = vmatprep.subr.mxu0 0.0
  %1314 = vmatpush1.msra.mxu0 0.0
  %1315 = vmatprep.subr.mxu0 0.0
  %1316 = vmatpush1.msra.mxu0 0.0
  %1317 = vmatprep.subr.mxu0 0.0
  %1318 = vmatpush1.msra.mxu0 0.0
  %1319 = vmatprep.subr.mxu0 0.0
  %1320 = vmatpush1.msra.mxu0 0.0
  %1321 = vmatprep.subr.mxu0 0.0
  %1322 = vmatpush1.msra.mxu0 0.0
  %1323 = vmatprep.subr.mxu0 0.0
  %1324 = vmatpush1.msra.mxu0 0.0
  %1325 = vmatprep.subr.mxu0 0.0
  %1326 = vmatpush1.msra.mxu0 0.0
  %1327 = vmatprep.subr.mxu0 0.0
  %1328 = vmatpush1.msra.mxu0 0.0
  %1329 = vmatprep.subr.mxu0 0.0
  %1330 = vmatpush1.msra.mxu0 0.0
  %1331 = vmatprep.subr.mxu0 0.0
  %1332 = vmatpush1.msra.mxu0 0.0
  %1333 = vmatprep.subr.mxu0 0.0
  %1334 = vmatpush1.msra.mxu0 0.0
  %1335 = vmatprep.subr.mxu0 0.0
  %1336 = vmatpush1.msra.mxu0 0.0
  %1337 = vmatprep.subr.mxu0 0.0
  %1338 = vmatpush1.msra.mxu0 0.0
  %1339 = vmatprep.subr.mxu0 0.0
  %1340 = vmatpush1.msra.mxu0 0.0
  %1341 = vmatprep.subr.mxu0 0.0
  %1342 = vmatpush1.msra.mxu0 0.0
  %1343 = vmatprep.subr.mxu0 0.0
  %1344 = vmatpush1.msra.mxu0 0.0
  %1345 = vmatprep.subr.mxu0 0.0
  %1346 = vmatpush1.msra.mxu0 0.0
  %1347 = vmatprep.subr.mxu0 0.0
  %1348 = vmatpush1.msra.mxu0 0.0
  %1349 = vmatprep.subr.mxu0 0.0
  %1350 = vmatpush1.msra.mxu0 0.0
  %1351 = vmatprep.subr.mxu0 0.0
  %1352 = vmatpush1.msra.mxu0 0.0
  %1353 = vmatprep.subr.mxu0 0.0
  %1354 = vmatpush1.msra.mxu0 0.0
  %1355 = vmatprep.subr.mxu0 0.0
  %1356 = vmatpush1.msra.mxu0 0.0
  %1357 = vmatprep.subr.mxu0 0.0
  %1358 = vmatpush1.msra.mxu0 0.0
  %1359 = vmatprep.subr.mxu0 0.0
  %1360 = vmatpush1.msra.mxu0 0.0
  %1361 = vmatprep.subr.mxu0 0.0
  %1362 = vmatpush1.msra.mxu0 0.0
  %1363 = vmatprep.mubr.f32.mxu0 0.0
  %1364 = vmatmul.mubr.f32.gmra.mrb[0].mxu0 %v1297
  %v1365 = vpop.f32.mrb[0].mxu0
  %v1366 = vadd.f32 0.0, %v1365
  %v1367 = vpop.f32.mrb[0].mxu0
  %v1368 = vadd.f32 0.0, %v1367
  %1369 = vdwg.mxu0
  %s1370 = scalar_lea.vmem [#allocation2], 48
  %v1371 = vld [vmem:[%s1370] sm:$0xff]
  %v1372 = vadd.f32 %v1366, %v1371
  %v1373 = vtanh.pop %v1372
  %v1374 = vmul.f32 %v1373, %v49
  %v1375 = vadd.f32 %v1374, %v50
  %v1376 = vmul.f32 %v1375, %v1191
  %1378 = vrot.lane.b32.xlu0 %v1375, 64
  %v1379 = vpop.permute.xlu0 %1378
  %v1381 = vmul.f32 %v1375, %v1379
  %1383 = vrot.lane.b32.xlu0 %v1381, 32
  %v1384 = vpop.permute.xlu0 %1383
  %v1386 = vadd.f32 %v1376, %v1384
  %v1387 = vtanh.pop %v1386
  %1389 = vrot.lane.b32.xlu0 %v1387, 64
  %v1390 = vpop.permute.xlu0 %1389
  %v1392 = vmul.f32 %v1375, %v1390
  %1394 = vrot.lane.b32.xlu0 %v1293, 32
  %v1395 = vpop.permute.xlu0 %1394
  %v1396 = vsel %vm221, %v1395, 0
  %1398 = vmatprep.subr.mxu0 0.0
  %1399 = vmatpush1.msra.mxu0 %v217
  %1400 = vmatprep.subr.mxu0 0.0
  %1401 = vmatpush1.msra.mxu0 %v218
  %1402 = vmatprep.subr.mxu0 0.0
  %1403 = vmatpush1.msra.mxu0 %v219
  %1404 = vmatprep.subr.mxu0 0.0
  %1405 = vmatpush1.msra.mxu0 %v220
  %1406 = vmatprep.subr.mxu0 0.0
  %1407 = vmatpush1.msra.mxu0 0.0
  %1408 = vmatprep.subr.mxu0 0.0
  %1409 = vmatpush1.msra.mxu0 0.0
  %1410 = vmatprep.subr.mxu0 0.0
  %1411 = vmatpush1.msra.mxu0 0.0
  %1412 = vmatprep.subr.mxu0 0.0
  %1413 = vmatpush1.msra.mxu0 0.0
  %1414 = vmatprep.subr.mxu0 0.0
  %1415 = vmatpush1.msra.mxu0 0.0
  %1416 = vmatprep.subr.mxu0 0.0
  %1417 = vmatpush1.msra.mxu0 0.0
  %1418 = vmatprep.subr.mxu0 0.0
  %1419 = vmatpush1.msra.mxu0 0.0
  %1420 = vmatprep.subr.mxu0 0.0
  %1421 = vmatpush1.msra.mxu0 0.0
  %1422 = vmatprep.subr.mxu0 0.0
  %1423 = vmatpush1.msra.mxu0 0.0
  %1424 = vmatprep.subr.mxu0 0.0
  %1425 = vmatpush1.msra.mxu0 0.0
  %1426 = vmatprep.subr.mxu0 0.0
  %1427 = vmatpush1.msra.mxu0 0.0
  %1428 = vmatprep.subr.mxu0 0.0
  %1429 = vmatpush1.msra.mxu0 0.0
  %1430 = vmatprep.subr.mxu0 0.0
  %1431 = vmatpush1.msra.mxu0 0.0
  %1432 = vmatprep.subr.mxu0 0.0
  %1433 = vmatpush1.msra.mxu0 0.0
  %1434 = vmatprep.subr.mxu0 0.0
  %1435 = vmatpush1.msra.mxu0 0.0
  %1436 = vmatprep.subr.mxu0 0.0
  %1437 = vmatpush1.msra.mxu0 0.0
  %1438 = vmatprep.subr.mxu0 0.0
  %1439 = vmatpush1.msra.mxu0 0.0
  %1440 = vmatprep.subr.mxu0 0.0
  %1441 = vmatpush1.msra.mxu0 0.0
  %1442 = vmatprep.subr.mxu0 0.0
  %1443 = vmatpush1.msra.mxu0 0.0
  %1444 = vmatprep.subr.mxu0 0.0
  %1445 = vmatpush1.msra.mxu0 0.0
  %1446 = vmatprep.subr.mxu0 0.0
  %1447 = vmatpush1.msra.mxu0 0.0
  %1448 = vmatprep.subr.mxu0 0.0
  %1449 = vmatpush1.msra.mxu0 0.0
  %1450 = vmatprep.subr.mxu0 0.0
  %1451 = vmatpush1.msra.mxu0 0.0
  %1452 = vmatprep.subr.mxu0 0.0
  %1453 = vmatpush1.msra.mxu0 0.0
  %1454 = vmatprep.subr.mxu0 0.0
  %1455 = vmatpush1.msra.mxu0 0.0
  %1456 = vmatprep.subr.mxu0 0.0
  %1457 = vmatpush1.msra.mxu0 0.0
  %1458 = vmatprep.subr.mxu0 0.0
  %1459 = vmatpush1.msra.mxu0 0.0
  %1460 = vmatprep.subr.mxu0 0.0
  %1461 = vmatpush1.msra.mxu0 0.0
  %1462 = vmatprep.mubr.f32.mxu0 0.0
  %1463 = vmatmul.mubr.f32.gmra.mrb[0].mxu0 %v1396
  %v1464 = vpop.f32.mrb[0].mxu0
  %v1465 = vadd.f32 %v1368, %v1464
  %v1466 = vpop.f32.mrb[0].mxu0
  %1467 = vdwg.mxu0
  %v1468 = vadd.f32 %v1465, %v491
  %v1469 = vtanh.pop %v1468
  %v1470 = vmul.f32 %v1469, %v49
  %v1471 = vadd.f32 %v1470, %v50
  %v1472 = vmul.f32 %v1471, %v1287
  %1474 = vrot.lane.b32.xlu0 %v1471, 64
  %v1475 = vpop.permute.xlu0 %1474
  %v1477 = vmul.f32 %v1471, %v1475
  %1479 = vrot.lane.b32.xlu0 %v1477, 32
  %v1480 = vpop.permute.xlu0 %1479
  %v1482 = vadd.f32 %v1472, %v1480
  %v1483 = vtanh.pop %v1482
  %1485 = vrot.lane.b32.xlu0 %v1483, 64
  %v1486 = vpop.permute.xlu0 %1485
  %v1488 = vmul.f32 %v1471, %v1486
  %1490 = vrot.lane.b32.xlu0 %v1392, 32
  %v1491 = vpop.permute.xlu0 %1490
  %v1492 = vsel %vm221, %v1491, 0
  %1494 = vmatprep.subr.mxu0 %v210
  %1495 = vmatpush1.msra.mxu0 %v209
  %1496 = vmatprep.subr.mxu0 %v212
  %1497 = vmatpush1.msra.mxu0 %v211
  %1498 = vmatprep.subr.mxu0 %v214
  %1499 = vmatpush1.msra.mxu0 %v213
  %1500 = vmatprep.subr.mxu0 %v216
  %1501 = vmatpush1.msra.mxu0 %v215
  %1502 = vmatprep.subr.mxu0 0.0
  %1503 = vmatpush1.msra.mxu0 0.0
  %1504 = vmatprep.subr.mxu0 0.0
  %1505 = vmatpush1.msra.mxu0 0.0
  %1506 = vmatprep.subr.mxu0 0.0
  %1507 = vmatpush1.msra.mxu0 0.0
  %1508 = vmatprep.subr.mxu0 0.0
  %1509 = vmatpush1.msra.mxu0 0.0
  %1510 = vmatprep.subr.mxu0 0.0
  %1511 = vmatpush1.msra.mxu0 0.0
  %1512 = vmatprep.subr.mxu0 0.0
  %1513 = vmatpush1.msra.mxu0 0.0
  %1514 = vmatprep.subr.mxu0 0.0
  %1515 = vmatpush1.msra.mxu0 0.0
  %1516 = vmatprep.subr.mxu0 0.0
  %1517 = vmatpush1.msra.mxu0 0.0
  %1518 = vmatprep.subr.mxu0 0.0
  %1519 = vmatpush1.msra.mxu0 0.0
  %1520 = vmatprep.subr.mxu0 0.0
  %1521 = vmatpush1.msra.mxu0 0.0
  %1522 = vmatprep.subr.mxu0 0.0
  %1523 = vmatpush1.msra.mxu0 0.0
  %1524 = vmatprep.subr.mxu0 0.0
  %1525 = vmatpush1.msra.mxu0 0.0
  %1526 = vmatprep.subr.mxu0 0.0
  %1527 = vmatpush1.msra.mxu0 0.0
  %1528 = vmatprep.subr.mxu0 0.0
  %1529 = vmatpush1.msra.mxu0 0.0
  %1530 = vmatprep.subr.mxu0 0.0
  %1531 = vmatpush1.msra.mxu0 0.0
  %1532 = vmatprep.subr.mxu0 0.0
  %1533 = vmatpush1.msra.mxu0 0.0
  %1534 = vmatprep.subr.mxu0 0.0
  %1535 = vmatpush1.msra.mxu0 0.0
  %1536 = vmatprep.subr.mxu0 0.0
  %1537 = vmatpush1.msra.mxu0 0.0
  %1538 = vmatprep.subr.mxu0 0.0
  %1539 = vmatpush1.msra.mxu0 0.0
  %1540 = vmatprep.subr.mxu0 0.0
  %1541 = vmatpush1.msra.mxu0 0.0
  %1542 = vmatprep.subr.mxu0 0.0
  %1543 = vmatpush1.msra.mxu0 0.0
  %1544 = vmatprep.subr.mxu0 0.0
  %1545 = vmatpush1.msra.mxu0 0.0
  %1546 = vmatprep.subr.mxu0 0.0
  %1547 = vmatpush1.msra.mxu0 0.0
  %1548 = vmatprep.subr.mxu0 0.0
  %1549 = vmatpush1.msra.mxu0 0.0
  %1550 = vmatprep.subr.mxu0 0.0
  %1551 = vmatpush1.msra.mxu0 0.0
  %1552 = vmatprep.subr.mxu0 0.0
  %1553 = vmatpush1.msra.mxu0 0.0
  %1554 = vmatprep.subr.mxu0 0.0
  %1555 = vmatpush1.msra.mxu0 0.0
  %1556 = vmatprep.subr.mxu0 0.0
  %1557 = vmatpush1.msra.mxu0 0.0
  %1558 = vmatprep.mubr.f32.mxu0 0.0
  %1559 = vmatmul.mubr.f32.gmra.mrb[0].mxu0 %v1492
  %v1560 = vpop.f32.mrb[0].mxu0
  %v1561 = vadd.f32 0.0, %v1560
  %v1562 = vpop.f32.mrb[0].mxu0
  %v1563 = vadd.f32 0.0, %v1562
  %1564 = vdwg.mxu0
  %s1565 = scalar_lea.vmem [#allocation2], 56
  %v1566 = vld [vmem:[%s1565] sm:$0xff]
  %v1567 = vadd.f32 %v1561, %v1566
  %v1568 = vtanh.pop %v1567
  %v1569 = vmul.f32 %v1568, %v49
  %v1570 = vadd.f32 %v1569, %v50
  %v1571 = vmul.f32 %v1570, %v1386
  %1573 = vrot.lane.b32.xlu0 %v1570, 64
  %v1574 = vpop.permute.xlu0 %1573
  %v1576 = vmul.f32 %v1570, %v1574
  %1578 = vrot.lane.b32.xlu0 %v1576, 32
  %v1579 = vpop.permute.xlu0 %1578
  %v1581 = vadd.f32 %v1571, %v1579
  %v1582 = vtanh.pop %v1581
  %1584 = vrot.lane.b32.xlu0 %v1582, 64
  %v1585 = vpop.permute.xlu0 %1584
  %v1587 = vmul.f32 %v1570, %v1585
  %1589 = vrot.lane.b32.xlu0 %v1488, 32
  %v1590 = vpop.permute.xlu0 %1589
  %v1591 = vsel %vm221, %v1590, 0
  %1593 = vmatprep.subr.mxu0 0.0
  %1594 = vmatpush1.msra.mxu0 %v217
  %1595 = vmatprep.subr.mxu0 0.0
  %1596 = vmatpush1.msra.mxu0 %v218
  %1597 = vmatprep.subr.mxu0 0.0
  %1598 = vmatpush1.msra.mxu0 %v219
  %1599 = vmatprep.subr.mxu0 0.0
  %1600 = vmatpush1.msra.mxu0 %v220
  %1601 = vmatprep.subr.mxu0 0.0
  %1602 = vmatpush1.msra.mxu0 0.0
  %1603 = vmatprep.subr.mxu0 0.0
  %1604 = vmatpush1.msra.mxu0 0.0
  %1605 = vmatprep.subr.mxu0 0.0
  %1606 = vmatpush1.msra.mxu0 0.0
  %1607 = vmatprep.subr.mxu0 0.0
  %1608 = vmatpush1.msra.mxu0 0.0
  %1609 = vmatprep.subr.mxu0 0.0
  %1610 = vmatpush1.msra.mxu0 0.0
  %1611 = vmatprep.subr.mxu0 0.0
  %1612 = vmatpush1.msra.mxu0 0.0
  %1613 = vmatprep.subr.mxu0 0.0
  %1614 = vmatpush1.msra.mxu0 0.0
  %1615 = vmatprep.subr.mxu0 0.0
  %1616 = vmatpush1.msra.mxu0 0.0
  %1617 = vmatprep.subr.mxu0 0.0
  %1618 = vmatpush1.msra.mxu0 0.0
  %1619 = vmatprep.subr.mxu0 0.0
  %1620 = vmatpush1.msra.mxu0 0.0
  %1621 = vmatprep.subr.mxu0 0.0
  %1622 = vmatpush1.msra.mxu0 0.0
  %1623 = vmatprep.subr.mxu0 0.0
  %1624 = vmatpush1.msra.mxu0 0.0
  %1625 = vmatprep.subr.mxu0 0.0
  %1626 = vmatpush1.msra.mxu0 0.0
  %1627 = vmatprep.subr.mxu0 0.0
  %1628 = vmatpush1.msra.mxu0 0.0
  %1629 = vmatprep.subr.mxu0 0.0
  %1630 = vmatpush1.msra.mxu0 0.0
  %1631 = vmatprep.subr.mxu0 0.0
  %1632 = vmatpush1.msra.mxu0 0.0
  %1633 = vmatprep.subr.mxu0 0.0
  %1634 = vmatpush1.msra.mxu0 0.0
  %1635 = vmatprep.subr.mxu0 0.0
  %1636 = vmatpush1.msra.mxu0 0.0
  %1637 = vmatprep.subr.mxu0 0.0
  %1638 = vmatpush1.msra.mxu0 0.0
  %1639 = vmatprep.subr.mxu0 0.0
  %1640 = vmatpush1.msra.mxu0 0.0
  %1641 = vmatprep.subr.mxu0 0.0
  %1642 = vmatpush1.msra.mxu0 0.0
  %1643 = vmatprep.subr.mxu0 0.0
  %1644 = vmatpush1.msra.mxu0 0.0
  %1645 = vmatprep.subr.mxu0 0.0
  %1646 = vmatpush1.msra.mxu0 0.0
  %1647 = vmatprep.subr.mxu0 0.0
  %1648 = vmatpush1.msra.mxu0 0.0
  %1649 = vmatprep.subr.mxu0 0.0
  %1650 = vmatpush1.msra.mxu0 0.0
  %1651 = vmatprep.subr.mxu0 0.0
  %1652 = vmatpush1.msra.mxu0 0.0
  %1653 = vmatprep.subr.mxu0 0.0
  %1654 = vmatpush1.msra.mxu0 0.0
  %1655 = vmatprep.subr.mxu0 0.0
  %1656 = vmatpush1.msra.mxu0 0.0
  %1657 = vmatprep.mubr.f32.mxu0 0.0
  %1658 = vmatmul.mubr.f32.gmra.mrb[0].mxu0 %v1591
  %v1659 = vpop.f32.mrb[0].mxu0
  %v1660 = vadd.f32 %v1563, %v1659
  %v1661 = vpop.f32.mrb[0].mxu0
  %1662 = vdwg.mxu0
  %v1663 = vadd.f32 %v1660, %v491
  %v1664 = vtanh.pop %v1663
  %v1665 = vmul.f32 %v1664, %v49
  %v1666 = vadd.f32 %v1665, %v50
  %v1667 = vmul.f32 %v1666, %v1482
  %1669 = vrot.lane.b32.xlu0 %v1666, 64
  %v1670 = vpop.permute.xlu0 %1669
  %v1672 = vmul.f32 %v1666, %v1670
  %1674 = vrot.lane.b32.xlu0 %v1672, 32
  %v1675 = vpop.permute.xlu0 %1674
  %v1677 = vadd.f32 %v1667, %v1675
  %v1678 = vtanh.pop %v1677
  %1680 = vrot.lane.b32.xlu0 %v1678, 64
  %v1681 = vpop.permute.xlu0 %1680
  %v1683 = vmul.f32 %v1666, %v1681
  %1685 = vrot.lane.b32.xlu0 %v1587, 32
  %v1686 = vpop.permute.xlu0 %1685
  %v1687 = vsel %vm221, %v1686, 0
  %1689 = vmatprep.subr.mxu0 %v210
  %1690 = vmatpush1.msra.mxu0 %v209
  %1691 = vmatprep.subr.mxu0 %v212
  %1692 = vmatpush1.msra.mxu0 %v211
  %1693 = vmatprep.subr.mxu0 %v214
  %1694 = vmatpush1.msra.mxu0 %v213
  %1695 = vmatprep.subr.mxu0 %v216
  %1696 = vmatpush1.msra.mxu0 %v215
  %1697 = vmatprep.subr.mxu0 0.0
  %1698 = vmatpush1.msra.mxu0 0.0
  %1699 = vmatprep.subr.mxu0 0.0
  %1700 = vmatpush1.msra.mxu0 0.0
  %1701 = vmatprep.subr.mxu0 0.0
  %1702 = vmatpush1.msra.mxu0 0.0
  %1703 = vmatprep.subr.mxu0 0.0
  %1704 = vmatpush1.msra.mxu0 0.0
  %1705 = vmatprep.subr.mxu0 0.0
  %1706 = vmatpush1.msra.mxu0 0.0
  %1707 = vmatprep.subr.mxu0 0.0
  %1708 = vmatpush1.msra.mxu0 0.0
  %1709 = vmatprep.subr.mxu0 0.0
  %1710 = vmatpush1.msra.mxu0 0.0
  %1711 = vmatprep.subr.mxu0 0.0
  %1712 = vmatpush1.msra.mxu0 0.0
  %1713 = vmatprep.subr.mxu0 0.0
  %1714 = vmatpush1.msra.mxu0 0.0
  %1715 = vmatprep.subr.mxu0 0.0
  %1716 = vmatpush1.msra.mxu0 0.0
  %1717 = vmatprep.subr.mxu0 0.0
  %1718 = vmatpush1.msra.mxu0 0.0
  %1719 = vmatprep.subr.mxu0 0.0
  %1720 = vmatpush1.msra.mxu0 0.0
  %1721 = vmatprep.subr.mxu0 0.0
  %1722 = vmatpush1.msra.mxu0 0.0
  %1723 = vmatprep.subr.mxu0 0.0
  %1724 = vmatpush1.msra.mxu0 0.0
  %1725 = vmatprep.subr.mxu0 0.0
  %1726 = vmatpush1.msra.mxu0 0.0
  %1727 = vmatprep.subr.mxu0 0.0
  %1728 = vmatpush1.msra.mxu0 0.0
  %1729 = vmatprep.subr.mxu0 0.0
  %1730 = vmatpush1.msra.mxu0 0.0
  %1731 = vmatprep.subr.mxu0 0.0
  %1732 = vmatpush1.msra.mxu0 0.0
  %1733 = vmatprep.subr.mxu0 0.0
  %1734 = vmatpush1.msra.mxu0 0.0
  %1735 = vmatprep.subr.mxu0 0.0
  %1736 = vmatpush1.msra.mxu0 0.0
  %1737 = vmatprep.subr.mxu0 0.0
  %1738 = vmatpush1.msra.mxu0 0.0
  %1739 = vmatprep.subr.mxu0 0.0
  %1740 = vmatpush1.msra.mxu0 0.0
  %1741 = vmatprep.subr.mxu0 0.0
  %1742 = vmatpush1.msra.mxu0 0.0
  %1743 = vmatprep.subr.mxu0 0.0
  %1744 = vmatpush1.msra.mxu0 0.0
  %1745 = vmatprep.subr.mxu0 0.0
  %1746 = vmatpush1.msra.mxu0 0.0
  %1747 = vmatprep.subr.mxu0 0.0
  %1748 = vmatpush1.msra.mxu0 0.0
  %1749 = vmatprep.subr.mxu0 0.0
  %1750 = vmatpush1.msra.mxu0 0.0
  %1751 = vmatprep.subr.mxu0 0.0
  %1752 = vmatpush1.msra.mxu0 0.0
  %1753 = vmatprep.mubr.f32.mxu0 0.0
  %1754 = vmatmul.mubr.f32.gmra.mrb[0].mxu0 %v1687
  %v1755 = vpop.f32.mrb[0].mxu0
  %v1756 = vpop.f32.mrb[0].mxu0
  %v1757 = vadd.f32 0.0, %v1756
  %1758 = vdwg.mxu0
  %1760 = vrot.lane.b32.xlu0 %v1683, 32
  %v1761 = vpop.permute.xlu0 %1760
  %v1762 = vsel %vm221, %v1761, 0
  %1764 = vmatprep.subr.mxu0 0.0
  %1765 = vmatpush1.msra.mxu0 %v217
  %1766 = vmatprep.subr.mxu0 0.0
  %1767 = vmatpush1.msra.mxu0 %v218
  %1768 = vmatprep.subr.mxu0 0.0
  %1769 = vmatpush1.msra.mxu0 %v219
  %1770 = vmatprep.subr.mxu0 0.0
  %1771 = vmatpush1.msra.mxu0 %v220
  %1772 = vmatprep.subr.mxu0 0.0
  %1773 = vmatpush1.msra.mxu0 0.0
  %1774 = vmatprep.subr.mxu0 0.0
  %1775 = vmatpush1.msra.mxu0 0.0
  %1776 = vmatprep.subr.mxu0 0.0
  %1777 = vmatpush1.msra.mxu0 0.0
  %1778 = vmatprep.subr.mxu0 0.0
  %1779 = vmatpush1.msra.mxu0 0.0
  %1780 = vmatprep.subr.mxu0 0.0
  %1781 = vmatpush1.msra.mxu0 0.0
  %1782 = vmatprep.subr.mxu0 0.0
  %1783 = vmatpush1.msra.mxu0 0.0
  %1784 = vmatprep.subr.mxu0 0.0
  %1785 = vmatpush1.msra.mxu0 0.0
  %1786 = vmatprep.subr.mxu0 0.0
  %1787 = vmatpush1.msra.mxu0 0.0
  %1788 = vmatprep.subr.mxu0 0.0
  %1789 = vmatpush1.msra.mxu0 0.0
  %1790 = vmatprep.subr.mxu0 0.0
  %1791 = vmatpush1.msra.mxu0 0.0
  %1792 = vmatprep.subr.mxu0 0.0
  %1793 = vmatpush1.msra.mxu0 0.0
  %1794 = vmatprep.subr.mxu0 0.0
  %1795 = vmatpush1.msra.mxu0 0.0
  %1796 = vmatprep.subr.mxu0 0.0
  %1797 = vmatpush1.msra.mxu0 0.0
  %1798 = vmatprep.subr.mxu0 0.0
  %1799 = vmatpush1.msra.mxu0 0.0
  %1800 = vmatprep.subr.mxu0 0.0
  %1801 = vmatpush1.msra.mxu0 0.0
  %1802 = vmatprep.subr.mxu0 0.0
  %1803 = vmatpush1.msra.mxu0 0.0
  %1804 = vmatprep.subr.mxu0 0.0
  %1805 = vmatpush1.msra.mxu0 0.0
  %1806 = vmatprep.subr.mxu0 0.0
  %1807 = vmatpush1.msra.mxu0 0.0
  %1808 = vmatprep.subr.mxu0 0.0
  %1809 = vmatpush1.msra.mxu0 0.0
  %1810 = vmatprep.subr.mxu0 0.0
  %1811 = vmatpush1.msra.mxu0 0.0
  %1812 = vmatprep.subr.mxu0 0.0
  %1813 = vmatpush1.msra.mxu0 0.0
  %1814 = vmatprep.subr.mxu0 0.0
  %1815 = vmatpush1.msra.mxu0 0.0
  %1816 = vmatprep.subr.mxu0 0.0
  %1817 = vmatpush1.msra.mxu0 0.0
  %1818 = vmatprep.subr.mxu0 0.0
  %1819 = vmatpush1.msra.mxu0 0.0
  %1820 = vmatprep.subr.mxu0 0.0
  %1821 = vmatpush1.msra.mxu0 0.0
  %1822 = vmatprep.subr.mxu0 0.0
  %1823 = vmatpush1.msra.mxu0 0.0
  %1824 = vmatprep.subr.mxu0 0.0
  %1825 = vmatpush1.msra.mxu0 0.0
  %1826 = vmatprep.subr.mxu0 0.0
  %1827 = vmatpush1.msra.mxu0 0.0
  %1828 = vmatprep.mubr.f32.mxu0 0.0
  %1829 = vmatmul.mubr.f32.gmra.mrb[0].mxu0 %v1762
  %v1830 = vpop.f32.mrb[0].mxu0
  %v1831 = vadd.f32 %v1757, %v1830
  %v1832 = vpop.f32.mrb[0].mxu0
  %1833 = vdwg.mxu0
  %v1834 = vadd.f32 %v1831, %v491
  %v1835 = vtanh.pop %v1834
  %v1836 = vmul.f32 %v1835, %v49
  %v1837 = vadd.f32 %v1836, %v50
  %v1838 = vmul.f32 %v1837, %v1677
  %1840 = vrot.lane.b32.xlu0 %v1837, 64
  %v1841 = vpop.permute.xlu0 %1840
  %v1843 = vmul.f32 %v1837, %v1841
  %1845 = vrot.lane.b32.xlu0 %v1843, 32
  %v1846 = vpop.permute.xlu0 %1845
  %v1848 = vadd.f32 %v1838, %v1846
  %v1849 = vtanh.pop %v1848
  %1851 = vrot.lane.b32.xlu0 %v1849, 64
  %v1852 = vpop.permute.xlu0 %1851
  %v1854 = vmul.f32 %v1837, %v1852
  %v1855 = vld [vmem:[%s7] sm:$0xff]
  %v1856 = vld [vmem:[%s7 + $0x8] sm:$0xff]
  %v1857 = vld [vmem:[%s7 + $0x10] sm:$0xff]
  %v1858 = vld [vmem:[%s7 + $0x18] sm:$0xff]
  %v1859 = vld [vmem:[%s1] sm:$0xff]
  %v1860 = vld [vmem:[#allocation3] sm:$0x1]
  %v1862 = vlaneseq
  %v1863 = vshrl.u32 %v1862, 7
  %v1864 = vsub.s32 0, %v1863
  %v1865 = vrot.slane %v1860, %v1864
  %v1867 = vmul.f32 %v1859, %v1865
  %1869 = vrot.lane.b32.xlu0 %v1854, 32
  %v1870 = vpop.permute.xlu0 %1869
  %v1871 = vsel %vm221, %v1870, 0
  %1873 = vmatprep.subr.mxu0 0.0
  %1874 = vmatpush1.msra.mxu0 %v1855
  %1875 = vmatprep.subr.mxu0 0.0
  %1876 = vmatpush1.msra.mxu0 %v1856
  %1877 = vmatprep.subr.mxu0 0.0
  %1878 = vmatpush1.msra.mxu0 %v1857
  %1879 = vmatprep.subr.mxu0 0.0
  %1880 = vmatpush1.msra.mxu0 %v1858
  %1881 = vmatprep.subr.mxu0 0.0
  %1882 = vmatpush1.msra.mxu0 0.0
  %1883 = vmatprep.subr.mxu0 0.0
  %1884 = vmatpush1.msra.mxu0 0.0
  %1885 = vmatprep.subr.mxu0 0.0
  %1886 = vmatpush1.msra.mxu0 0.0
  %1887 = vmatprep.subr.mxu0 0.0
  %1888 = vmatpush1.msra.mxu0 0.0
  %1889 = vmatprep.subr.mxu0 0.0
  %1890 = vmatpush1.msra.mxu0 0.0
  %1891 = vmatprep.subr.mxu0 0.0
  %1892 = vmatpush1.msra.mxu0 0.0
  %1893 = vmatprep.subr.mxu0 0.0
  %1894 = vmatpush1.msra.mxu0 0.0
  %1895 = vmatprep.subr.mxu0 0.0
  %1896 = vmatpush1.msra.mxu0 0.0
  %1897 = vmatprep.subr.mxu0 0.0
  %1898 = vmatpush1.msra.mxu0 0.0
  %1899 = vmatprep.subr.mxu0 0.0
  %1900 = vmatpush1.msra.mxu0 0.0
  %1901 = vmatprep.subr.mxu0 0.0
  %1902 = vmatpush1.msra.mxu0 0.0
  %1903 = vmatprep.subr.mxu0 0.0
  %1904 = vmatpush1.msra.mxu0 0.0
  %1905 = vmatprep.subr.mxu0 0.0
  %1906 = vmatpush1.msra.mxu0 0.0
  %1907 = vmatprep.subr.mxu0 0.0
  %1908 = vmatpush1.msra.mxu0 0.0
  %1909 = vmatprep.subr.mxu0 0.0
  %1910 = vmatpush1.msra.mxu0 0.0
  %1911 = vmatprep.subr.mxu0 0.0
  %1912 = vmatpush1.msra.mxu0 0.0
  %1913 = vmatprep.subr.mxu0 0.0
  %1914 = vmatpush1.msra.mxu0 0.0
  %1915 = vmatprep.subr.mxu0 0.0
  %1916 = vmatpush1.msra.mxu0 0.0
  %1917 = vmatprep.subr.mxu0 0.0
  %1918 = vmatpush1.msra.mxu0 0.0
  %1919 = vmatprep.subr.mxu0 0.0
  %1920 = vmatpush1.msra.mxu0 0.0
  %1921 = vmatprep.subr.mxu0 0.0
  %1922 = vmatpush1.msra.mxu0 0.0
  %1923 = vmatprep.subr.mxu0 0.0
  %1924 = vmatpush1.msra.mxu0 0.0
  %1925 = vmatprep.subr.mxu0 0.0
  %1926 = vmatpush1.msra.mxu0 0.0
  %1927 = vmatprep.subr.mxu0 0.0
  %1928 = vmatpush1.msra.mxu0 0.0
  %1929 = vmatprep.subr.mxu0 0.0
  %1930 = vmatpush1.msra.mxu0 0.0
  %1931 = vmatprep.subr.mxu0 0.0
  %1932 = vmatpush1.msra.mxu0 0.0
  %1933 = vmatprep.subr.mxu0 0.0
  %1934 = vmatpush1.msra.mxu0 0.0
  %1935 = vmatprep.subr.mxu0 0.0
  %1936 = vmatpush1.msra.mxu0 0.0
  %1937 = vmatprep.mubr.f32.mxu0 0.0
  %1938 = vmatmul.mubr.f32.gmra.mrb[0].mxu0 %v1871
  %v1939 = vpop.f32.mrb[0].mxu0
  %v1940 = vadd.f32 %v1867, %v1939
  %v1941 = vpop.f32.mrb[0].mxu0
  %1942 = vdwg.mxu0
  %v1943 = vld [vmem:[%s2] sm:$0xff]
  %v1944 = vld [vmem:[#allocation4] sm:$0x1]
  %v1946 = vlaneseq
  %v1947 = vshrl.u32 %v1946, 7
  %v1948 = vsub.s32 0, %v1947
  %v1949 = vrot.slane %v1944, %v1948
  %v1951 = vmul.f32 %v1943, %v1949
  %v1952 = vadd.f32 %v1940, %v1951
  %v1953 = vld [vmem:[#allocation5] sm:$0x1]
  %v1955 = vlaneseq
  %v1956 = vshrl.u32 %v1955, 7
  %v1957 = vsub.s32 0, %v1956
  %v1958 = vrot.slane %v1953, %v1957
  %v1960 = vadd.f32 %v1952, %v1958
  %vm1961 = vcmask 7168
  %1962 = vst.msk [vmem:[%s11] sm:$0xff] %vm1961, %v1960
  // Predicated region
  $region46: #{lstm_regression_forward.1} parent=0 // pred_check
    _
  $region47: #{lstm_regression_forward.1} parent=0 // pred_check_branch
    %1964 = sbr.rel (0) target = $region49
  $region48: #{lstm_regression_forward.1} parent=0 // pred_region
    _
  $region49: #{lstm_regression_forward.1} parent=0 // pred_fallthru
    _
  // Predicated region
  $region50: #{lstm_regression_forward.1} parent=0 // pred_check
    _
  $region51: #{lstm_regression_forward.1} parent=0 // pred_check_branch
    %1966 = sbr.rel (0) target = $region53
  $region52: #{lstm_regression_forward.1} parent=0 // pred_region
    _
  $region53: #{lstm_regression_forward.1} parent=0 // pred_fallthru
    _

</llo_original>
